<compile_context>
chip_gen: v6e
topology: v6e:2x2x1
jax: 0.10.0
libtpu: 0.0.40
codegen_flags: <defaults>
</compile_context>

<pallas_src>
import math

import jax
import jax.numpy as jnp
from jax import lax
from jax.experimental import pallas as pl
from jax.experimental.pallas import tpu as pltpu

_INV_SQRT2 = 1.0 / math.sqrt(2.0)
_LANE = 128
_TS_CAP = 4096  # lanes; bandwidth roofline saturates well below this (512-1024)


# --------------------------------------------------------------------------- hw query

def _tpu_hw():
    """(per-core VMEM capacity bytes, TensorCores per chip), with safe fallbacks."""
    cap = 128 * 1024 * 1024
    cores = 1
    try:
        info = pltpu.get_tpu_info()
        cap = int(getattr(info, "vmem_capacity_bytes", cap))
        for name in ("num_cores", "core_count", "tensorcores_per_chip",
                     "num_tensorcores"):
            v = getattr(info, name, None)
            if v:
                cores = int(v)
                break
        else:
            # Heuristic: v7x exposes 64 MiB per TensorCore and has 2 TCs per chip.
            cores = 2 if cap <= 80 * 1024 * 1024 else 1
    except Exception:
        pass
    return cap, cores


# --------------------------------------------------------------------------- kernel

def _make_kernel(add_residual: bool, external_shortcut: bool, approx_gelu: bool):
    """Build a kernel variant; residual / shortcut / GELU flavor are compile-time."""

    def body(x_ref, sc_ref, w1_ref, b1_ref, w2_ref, b2_ref, o_ref):
        # x_ref:  (D, TS)  channel-major tile (batch dim squeezed), native dtype
        # w1_ref: (A, D)   ln1.weight (PyTorch layout, no transpose)
        # b1_ref: (A, 1)   f32
        # w2_ref: (D, A)   ln2.weight
        # b2_ref: (D, 1)   f32
        x = x_ref[...]

        # ln1: (A, D) @ (D, TS) -> (A, TS), f32 accumulation on the MXU.
        h = jnp.dot(w1_ref[...], x, preferred_element_type=jnp.float32) + b1_ref[...]

        if approx_gelu:
            # tanh GELU -> EUP slot; slightly diverges from torch's exact erf GELU.
            h = jax.nn.gelu(h, approximate=True)
        else:
            # Exact (erf-based) GELU, matching torch.nn.GELU default.
            h = 0.5 * h * (1.0 + lax.erf(h * _INV_SQRT2))

        # ln2: (D, A) @ (A, TS) -> (D, TS).
        out = jnp.dot(w2_ref[...], h.astype(w2_ref.dtype),
                      preferred_element_type=jnp.float32) + b2_ref[...]

        if add_residual:
            res = sc_ref[...] if external_shortcut else x
            out = out + res.astype(jnp.float32)

        # NOTE: ragged boundary tiles compute on padding lanes; the output write is
        # masked by Pallas so this is only wasted work. Do not add reductions over
        # the spatial tile without masking the padding.
        o_ref[...] = out.astype(o_ref.dtype)

    if external_shortcut:
        def kernel(x_ref, sc_ref, w1_ref, b1_ref, w2_ref, b2_ref, o_ref):
            body(x_ref, sc_ref, w1_ref, b1_ref, w2_ref, b2_ref, o_ref)
    else:
        def kernel(x_ref, w1_ref, b1_ref, w2_ref, b2_ref, o_ref):
            body(x_ref, None, w1_ref, b1_ref, w2_ref, b2_ref, o_ref)
    return kernel


# --------------------------------------------------------------------------- tiling

def _auto_spatial_tile(S, D, A, x_itemsize, w_itemsize, n_token_streams,
                       vmem_budget_bytes, weights_single_buffered):
    """Lane-dense spatial tile: fits the VMEM budget, capped at _TS_CAP lanes,
    floored so DMA row runs stay long enough for good HBM burst efficiency."""
    wbuf = 1 if weights_single_buffered else 2
    weight_bytes = wbuf * (2 * A * D * w_itemsize + 4 * (A + D))
    # Bytes per spatial column:
    #  - double-buffered pipelined token streams (x [+ ext shortcut] + out), native dtype
    #  - f32 intermediates actually materialized by the body:
    #      h (A,), pre-cast copy of h (A,), 2nd-matmul f32 output (D,), residual upcast (D,)
    #  - store-staging copy in the output dtype (D,)
    per_col = (2 * D * x_itemsize * n_token_streams
               + 4 * (2 * A + 2 * D)
               + D * x_itemsize)
    avail = int(0.75 * vmem_budget_bytes) - weight_bytes
    ts = max(avail, 0) // max(per_col, 1)
    ts = min(ts, _TS_CAP)
    if ts >= S:
        return S                     # full spatial extent (legal even if S % 128 != 0)
    floor = 512 if x_itemsize >= 4 else 1024   # keep per-row DMA runs >= 2 KiB
    if floor < S and floor * per_col + weight_bytes <= vmem_budget_bytes:
        ts = max(ts, floor)
    ts = (ts // _LANE) * _LANE
    return max(_LANE, min(ts, _TS_CAP))


# --------------------------------------------------------------------------- wrapper

def sce_adapter_forward(x_nchw, params, *, x_shortcut=None, use_shortcut=True,
                        spatial_tile=None, vmem_budget_bytes=None,
                        gelu_approximate=False):
    """Forward pass matching SCEAdapter.forward for 4-D NCHW inputs."""
    B, D, H, W = x_nchw.shape
    S = H * W
    A = params["w1"].shape[0]

    # (B, D, H, W) -> (B, D, S): contiguous merge of the last two dims, no data movement.
    x3 = x_nchw.reshape(B, D, S)
    ext_sc = use_shortcut and (x_shortcut is not None)
    sc3 = x_shortcut.reshape(B, D, S) if ext_sc else None

    x_itemsize = jnp.dtype(x3.dtype).itemsize
    w_itemsize = jnp.dtype(params["w1"].dtype).itemsize
    n_streams = 2 + (1 if ext_sc else 0)    # x + out (+ external shortcut)

    # Generation-aware VMEM budgeting: ~50% of per-core capacity by default, and
    # clamp user-supplied budgets to 75% of capacity (a v6e-sized budget must not
    # blow v7x's 64 MiB/TC).
    vmem_cap, n_cores = _tpu_hw()
    budget = (vmem_cap // 2) if vmem_budget_bytes is None else int(vmem_budget_bytes)
    budget = max(4 * 1024 * 1024, min(budget, (vmem_cap * 3) // 4))

    if spatial_tile is None:
        ts = _auto_spatial_tile(S, D, A, x_itemsize, w_itemsize, n_streams,
                                budget, weights_single_buffered=True)
        if n_cores >= 2:
            # Only v7x-class chips (2 TensorCores) benefit from splitting; on a
            # single-TC chip splitting just adds per-step overhead.
            n_s = -(-S // ts)
            total = B * n_s
            if total < 2 and S >= 2 * _LANE:
                # Give both TensorCores work.
                ts = min(ts, (((S + 1) // 2 + _LANE - 1) // _LANE) * _LANE)
            elif total % 2 == 1 and total < 16 and S > ts:
                # Best-effort nudge to an even total step count (byte-balanced TCs).
                cand = max(_LANE, ((-(-S // (n_s + 1)) + _LANE - 1) // _LANE) * _LANE)
                if (B * (-(-S // cand))) % 2 == 0:
                    ts = cand
    else:
        ts = int(spatial_tile)
    ts = min(ts, S)

    n_s = -(-S // ts)                 # cdiv; boundary tile is masked by Pallas
    grid = (B, n_s)

    # Biases pre-cast to f32 once here (not per grid step inside the kernel).
    b1 = params["b1"].astype(jnp.float32).reshape(A, 1)
    b2 = params["b2"].astype(jnp.float32).reshape(D, 1)

    kernel = _make_kernel(add_residual=use_shortcut, external_shortcut=ext_sc,
                          approx_gelu=gelu_approximate)

    weight_bytes = 2 * A * D * w_itemsize + 4 * (A + D)
    cost = pl.CostEstimate(
        flops=4 * A * D * S * B,                 # two matmuls, 2*A*D*S*B flops each
        transcendentals=A * S * B,               # one erf/tanh per element of h
        bytes_accessed=n_streams * B * D * S * x_itemsize + weight_bytes,
    )

    def run(buffer_weights_once):
        tok_spec = pl.BlockSpec((None, D, ts), lambda b, s: (b, 0, s))
        if buffer_weights_once:
            # Constant index_map -> never re-DMA'd; single buffer halves their footprint.
            full = lambda shape: pl.BlockSpec(shape, lambda b, s: (0, 0),
                                              pipeline_mode=pl.Buffered(1))
        else:
            full = lambda shape: pl.BlockSpec(shape, lambda b, s: (0, 0))

        in_specs = [tok_spec]
        args = [x3]
        if ext_sc:
            in_specs.append(tok_spec)
            args.append(sc3)
        in_specs += [full((A, D)), full((A, 1)), full((D, A)), full((D, 1))]
        args += [params["w1"], b1, params["w2"], b2]

        return pl.pallas_call(
            kernel,
            out_shape=jax.ShapeDtypeStruct((B, D, S), x3.dtype),
            grid_spec=pltpu.PrefetchScalarGridSpec(
                num_scalar_prefetch=0,
                grid=grid,
                in_specs=in_specs,
                out_specs=tok_spec,
            ),
            compiler_params=pltpu.CompilerParams(
                dimension_semantics=("parallel", "parallel"),
                vmem_limit_bytes=int(budget),
            ),
            cost_estimate=cost,
        )(*args)

    try:
        out3 = run(True)
    except Exception:
        # pl.Buffered(1) on constant specs not accepted by this jax/Mosaic version:
        # fall back to default double-buffered weight specs (tiny VMEM delta).
        out3 = run(False)

    return out3.reshape(B, D, H, W)


# --------------------------------------------------------------------------- params

def init_params(key, dim, adapter_length, zero_init_last=True, use_bias=True,
                dtype=jnp.float32):
    """Init mirroring the PyTorch module; weights stored in PyTorch layout (out, in)."""
    k1, k2, k3, k4 = jax.random.split(key, 4)
    bound1 = 1.0 / math.sqrt(dim)   # kaiming_uniform(a=sqrt(5)) == U(-1/sqrt(fan_in), ...)
    w1 = jax.random.uniform(k1, (adapter_length, dim), jnp.float32, -bound1, bound1)
    b1 = (jax.random.uniform(k2, (adapter_length,), jnp.float32, -bound1, bound1)
          if use_bias else jnp.zeros((adapter_length,), jnp.float32))
    if zero_init_last:
        w2 = jnp.zeros((dim, adapter_length), jnp.float32)
        b2 = jnp.zeros((dim,), jnp.float32)
    else:
        bound2 = 1.0 / math.sqrt(adapter_length)
        w2 = jax.random.uniform(k3, (dim, adapter_length), jnp.float32, -bound2, bound2)
        b2 = (jax.random.uniform(k4, (dim,), jnp.float32, -bound2, bound2)
              if use_bias else jnp.zeros((dim,), jnp.float32))
    return {
        "w1": w1.astype(dtype),                                # (A, D) == ln1.weight
        "b1": b1.reshape(adapter_length, 1).astype(jnp.float32),
        "w2": w2.astype(dtype),                                # (D, A) == ln2.weight
        "b2": b2.reshape(dim, 1).astype(jnp.float32),
    }


# --------------------------------------------------------------------------- reference

def _reference(x_nchw, params, x_shortcut=None, use_shortcut=True):
    b, d, hh, ww = x_nchw.shape
    x = x_nchw.reshape(b, d, hh * ww).astype(jnp.float32)
    w1 = params["w1"].astype(jnp.float32)
    w2 = params["w2"].astype(jnp.float32)
    h = jnp.einsum("ad,bds->bas", w1, x, precision=lax.Precision.HIGHEST)
    h = h + params["b1"].astype(jnp.float32).reshape(-1, 1)[None]
    h = jax.nn.gelu(h, approximate=False)
    out = jnp.einsum("da,bas->bds", w2, h, precision=lax.Precision.HIGHEST)
    out = out + params["b2"].astype(jnp.float32).reshape(-1, 1)[None]
    if use_shortcut:
        sc = x if x_shortcut is None else \
            x_shortcut.reshape(b, d, hh * ww).astype(jnp.float32)
        out = out + sc
    return out.reshape(b, d, hh, ww)


# --------------------------------------------------------------------------- demo

if __name__ == "__main__":
    key = jax.random.PRNGKey(0)
    kx1, kp1, kx2, kp2, ksc = jax.random.split(key, 5)

    # Case 1: lane-dense channels, auto (hw-derived) tile, default internal shortcut.
    b1_, d1_, h1_, w1_ = 2, 128, 16, 16
    x1 = jax.random.normal(kx1, (b1_, d1_, h1_, w1_), jnp.float32)
    p1 = init_params(kp1, d1_, 16, zero_init_last=False, use_bias=True)
    out1 = jax.block_until_ready(sce_adapter_forward(x1, p1))
    ref1 = _reference(x1, p1)
    assert out1.shape == (b1_, d1_, h1_, w1_)
    assert jnp.allclose(out1, ref1, atol=1e-4, rtol=1e-4), "case 1 mismatch"

    # Case 2: ragged spatial tiling (S=144, tile=128) + external shortcut tensor.
    b2_, d2_, h2_, w2_ = 2, 64, 12, 12
    x2 = jax.random.normal(kx2, (b2_, d2_, h2_, w2_), jnp.float32)
    sc2 = jax.random.normal(ksc, (b2_, d2_, h2_, w2_), jnp.float32)
    p2 = init_params(kp2, d2_, 8, zero_init_last=False, use_bias=True)
    out2 = jax.block_until_ready(
        sce_adapter_forward(x2, p2, x_shortcut=sc2, spatial_tile=128))
    ref2 = _reference(x2, p2, x_shortcut=sc2)
    assert jnp.allclose(out2, ref2, atol=1e-4, rtol=1e-4), "case 2 mismatch"

    # Case 3: use_shortcut=False — compile-time gated, no zeros tensor materialized.
    out3 = jax.block_until_ready(
        sce_adapter_forward(x2, p2, use_shortcut=False, spatial_tile=128))
    ref3 = _reference(x2, p2, use_shortcut=False)
    assert jnp.allclose(out3, ref3, atol=1e-4, rtol=1e-4), "case 3 mismatch"

    # Case 4: bf16 I/O + bf16 weights (the ~2x HBM-bytes lever), auto tile, odd batch.
    b4_, d4_, h4_, w4_ = 1, 64, 20, 20
    x4 = jax.random.normal(kx1, (b4_, d4_, h4_, w4_), jnp.float32).astype(jnp.bfloat16)
    p4 = init_params(kp2, d4_, 8, zero_init_last=False, use_bias=True,
                     dtype=jnp.bfloat16)
    out4 = jax.block_until_ready(sce_adapter_forward(x4, p4))
    ref4 = _reference(x4, p4)
    assert jnp.allclose(out4.astype(jnp.float32), ref4, atol=6e-2, rtol=6e-2), \
        "case 4 mismatch"

    print("KERNEL_OK")
</pallas_src>

<mosaic_0001>
module attributes {stable_mosaic.version = 11 : i64} {
  func.func @kernel(%arg0: i32, %arg1: i32, %arg2: memref<1x128x256xf32, #tpu.memory_space<vmem>>, %arg3: memref<16x128xf32, #tpu.memory_space<vmem>>, %arg4: memref<16x1xf32, #tpu.memory_space<vmem>>, %arg5: memref<128x16xf32, #tpu.memory_space<vmem>>, %arg6: memref<128x1xf32, #tpu.memory_space<vmem>>, %arg7: memref<1x128x256xf32, #tpu.memory_space<vmem>>) attributes {dimension_semantics = [#tpu.dimension_semantics<parallel>, #tpu.dimension_semantics<parallel>], iteration_bounds = array<i64: 2, 1>, scalar_prefetch = 0 : i64, scratch_operands = 0 : i64, tpu.core_type = #tpu.core_type<tc>, window_params = [{transform_indices = @transform_0, window_bounds = array<i64: 1, 128, 256>}, {pipeline_mode = #tpu.pipeline_mode<synchronous>, transform_indices = @transform_1, window_bounds = array<i64: 16, 128>}, {pipeline_mode = #tpu.pipeline_mode<synchronous>, transform_indices = @transform_2, window_bounds = array<i64: 16, 1>}, {pipeline_mode = #tpu.pipeline_mode<synchronous>, transform_indices = @transform_3, window_bounds = array<i64: 128, 16>}, {pipeline_mode = #tpu.pipeline_mode<synchronous>, transform_indices = @transform_4, window_bounds = array<i64: 128, 1>}, {transform_indices = @transform_5, window_bounds = array<i64: 1, 128, 256>}]} {
    %c0 = arith.constant 0 : index
    %c0_0 = arith.constant 0 : index
    %c0_1 = arith.constant 0 : index
    %0 = vector.load %arg2[%c0, %c0_0, %c0_1] : memref<1x128x256xf32, #tpu.memory_space<vmem>>, vector<1x128x256xf32>
    %1 = vector.shape_cast %0 : vector<1x128x256xf32> to vector<128x256xf32>
    %c0_2 = arith.constant 0 : index
    %c0_3 = arith.constant 0 : index
    %2 = vector.load %arg3[%c0_2, %c0_3] : memref<16x128xf32, #tpu.memory_space<vmem>>, vector<16x128xf32>
    %cst = arith.constant dense<0.000000e+00> : vector<16x256xf32>
    %3 = tpu.matmul %2, %1, %cst {dimension_numbers = #tpu.dot_dimension_numbers<[1], [0], [0], [1], [0, 0, 1, 1], [], []>} : vector<16x128xf32>, vector<128x256xf32>, vector<16x256xf32> -> vector<16x256xf32>
    %c0_4 = arith.constant 0 : index
    %c0_5 = arith.constant 0 : index
    %4 = vector.load %arg4[%c0_4, %c0_5] : memref<16x1xf32, #tpu.memory_space<vmem>>, vector<16x1xf32>
    %5 = vector.broadcast %4 : vector<16x1xf32> to vector<16x256xf32>
    %6 = arith.addf %3, %5 : vector<16x256xf32>
    %cst_6 = arith.constant 5.000000e-01 : f32
    %7 = vector.broadcast %cst_6 : f32 to vector<16x256xf32>
    %8 = arith.mulf %7, %6 : vector<16x256xf32>
    %cst_7 = arith.constant 0.707106769 : f32
    %9 = vector.broadcast %cst_7 : f32 to vector<16x256xf32>
    %10 = arith.mulf %6, %9 : vector<16x256xf32>
    %11 = math.erf %10 : vector<16x256xf32>
    %cst_8 = arith.constant 1.000000e+00 : f32
    %12 = vector.broadcast %cst_8 : f32 to vector<16x256xf32>
    %13 = arith.addf %12, %11 : vector<16x256xf32>
    %14 = arith.mulf %8, %13 : vector<16x256xf32>
    %c0_9 = arith.constant 0 : index
    %c0_10 = arith.constant 0 : index
    %15 = vector.load %arg5[%c0_9, %c0_10] : memref<128x16xf32, #tpu.memory_space<vmem>>, vector<128x16xf32>
    %cst_11 = arith.constant dense<0.000000e+00> : vector<128x256xf32>
    %16 = tpu.matmul %15, %14, %cst_11 {dimension_numbers = #tpu.dot_dimension_numbers<[1], [0], [0], [1], [0, 0, 1, 1], [], []>} : vector<128x16xf32>, vector<16x256xf32>, vector<128x256xf32> -> vector<128x256xf32>
    %c0_12 = arith.constant 0 : index
    %c0_13 = arith.constant 0 : index
    %17 = vector.load %arg6[%c0_12, %c0_13] : memref<128x1xf32, #tpu.memory_space<vmem>>, vector<128x1xf32>
    %18 = vector.broadcast %17 : vector<128x1xf32> to vector<128x256xf32>
    %19 = arith.addf %16, %18 : vector<128x256xf32>
    %20 = arith.addf %19, %1 : vector<128x256xf32>
    %c0_14 = arith.constant 0 : index
    %c0_15 = arith.constant 0 : index
    %c0_16 = arith.constant 0 : index
    %21 = vector.load %arg7[%c0_14, %c0_15, %c0_16] : memref<1x128x256xf32, #tpu.memory_space<vmem>>, vector<1x128x256xf32>
    %22 = vector.shape_cast %21 : vector<1x128x256xf32> to vector<128x256xf32>
    %23 = vector.shape_cast %20 : vector<128x256xf32> to vector<1x128x256xf32>
    tpu.vector_store %arg7[%c0_14, %c0_15, %c0_16], %23 {strides = array<i32>} : memref<1x128x256xf32, #tpu.memory_space<vmem>>, vector<1x128x256xf32>,
    return
  }
  func.func @transform_0(%arg0: i32, %arg1: i32) -> (i32, i32, i32) {
    %c0_i32 = arith.constant 0 : i32
    %c0_i32_0 = arith.constant 0 : i32
    return %arg0, %c0_i32, %arg1 : i32, i32, i32
  }
  func.func @transform_1(%arg0: i32, %arg1: i32) -> (i32, i32) {
    %c0_i32 = arith.constant 0 : i32
    %c0_i32_0 = arith.constant 0 : i32
    %c0_i32_1 = arith.constant 0 : i32
    return %c0_i32, %c0_i32_0 : i32, i32
  }
  func.func @transform_2(%arg0: i32, %arg1: i32) -> (i32, i32) {
    %c0_i32 = arith.constant 0 : i32
    %c0_i32_0 = arith.constant 0 : i32
    %c0_i32_1 = arith.constant 0 : i32
    return %c0_i32, %c0_i32_0 : i32, i32
  }
  func.func @transform_3(%arg0: i32, %arg1: i32) -> (i32, i32) {
    %c0_i32 = arith.constant 0 : i32
    %c0_i32_0 = arith.constant 0 : i32
    %c0_i32_1 = arith.constant 0 : i32
    return %c0_i32, %c0_i32_0 : i32, i32
  }
  func.func @transform_4(%arg0: i32, %arg1: i32) -> (i32, i32) {
    %c0_i32 = arith.constant 0 : i32
    %c0_i32_0 = arith.constant 0 : i32
    %c0_i32_1 = arith.constant 0 : i32
    return %c0_i32, %c0_i32_0 : i32, i32
  }
  func.func @transform_5(%arg0: i32, %arg1: i32) -> (i32, i32, i32) {
    %c0_i32 = arith.constant 0 : i32
    %c0_i32_0 = arith.constant 0 : i32
    return %arg0, %c0_i32, %arg1 : i32, i32, i32
  }
}

module attributes {stable_mosaic.version = 11 : i64} {
  func.func @kernel(%arg0: i32, %arg1: i32, %arg2: memref<1x128x256xf32, #tpu.memory_space<vmem>>, %arg3: memref<16x128xf32, #tpu.memory_space<vmem>>, %arg4: memref<16x1xf32, #tpu.memory_space<vmem>>, %arg5: memref<128x16xf32, #tpu.memory_space<vmem>>, %arg6: memref<128x1xf32, #tpu.memory_space<vmem>>, %arg7: memref<1x128x256xf32, #tpu.memory_space<vmem>>) attributes {dimension_semantics = [#tpu.dimension_semantics<parallel>, #tpu.dimension_semantics<parallel>], iteration_bounds = array<i64: 2, 1>, scalar_prefetch = 0 : i64, scratch_operands = 0 : i64, tpu.core_type = #tpu.core_type<tc>, window_params = [{transform_indices = @transform_0, window_bounds = array<i64: 1, 128, 256>}, {pipeline_mode = #tpu.pipeline_mode<synchronous>, transform_indices = @transform_1, window_bounds = array<i64: 16, 128>}, {pipeline_mode = #tpu.pipeline_mode<synchronous>, transform_indices = @transform_2, window_bounds = array<i64: 16, 1>}, {pipeline_mode = #tpu.pipeline_mode<synchronous>, transform_indices = @transform_3, window_bounds = array<i64: 128, 16>}, {pipeline_mode = #tpu.pipeline_mode<synchronous>, transform_indices = @transform_4, window_bounds = array<i64: 128, 1>}, {transform_indices = @transform_5, window_bounds = array<i64: 1, 128, 256>}]} {
    %c0 = arith.constant 0 : index
    %c0_0 = arith.constant 0 : index
    %c0_1 = arith.constant 0 : index
    %0 = vector.load %arg2[%c0, %c0_0, %c0_1] : memref<1x128x256xf32, #tpu.memory_space<vmem>>, vector<1x128x256xf32>
    %1 = vector.shape_cast %0 : vector<1x128x256xf32> to vector<128x256xf32>
    %c0_2 = arith.constant 0 : index
    %c0_3 = arith.constant 0 : index
    %2 = vector.load %arg3[%c0_2, %c0_3] : memref<16x128xf32, #tpu.memory_space<vmem>>, vector<16x128xf32>
    %cst = arith.constant dense<0.000000e+00> : vector<16x256xf32>
    %3 = tpu.matmul %2, %1, %cst {dimension_numbers = #tpu.dot_dimension_numbers<[1], [0], [0], [1], [0, 0, 1, 1], [], []>} : vector<16x128xf32>, vector<128x256xf32>, vector<16x256xf32> -> vector<16x256xf32>
    %c0_4 = arith.constant 0 : index
    %c0_5 = arith.constant 0 : index
    %4 = vector.load %arg4[%c0_4, %c0_5] : memref<16x1xf32, #tpu.memory_space<vmem>>, vector<16x1xf32>
    %5 = vector.broadcast %4 : vector<16x1xf32> to vector<16x256xf32>
    %6 = arith.addf %3, %5 : vector<16x256xf32>
    %cst_6 = arith.constant 5.000000e-01 : f32
    %7 = vector.broadcast %cst_6 : f32 to vector<16x256xf32>
    %8 = arith.mulf %7, %6 : vector<16x256xf32>
    %cst_7 = arith.constant 0.707106769 : f32
    %9 = vector.broadcast %cst_7 : f32 to vector<16x256xf32>
    %10 = arith.mulf %6, %9 : vector<16x256xf32>
    %11 = math.erf %10 : vector<16x256xf32>
    %cst_8 = arith.constant 1.000000e+00 : f32
    %12 = vector.broadcast %cst_8 : f32 to vector<16x256xf32>
    %13 = arith.addf %12, %11 : vector<16x256xf32>
    %14 = arith.mulf %8, %13 : vector<16x256xf32>
    %c0_9 = arith.constant 0 : index
    %c0_10 = arith.constant 0 : index
    %15 = vector.load %arg5[%c0_9, %c0_10] : memref<128x16xf32, #tpu.memory_space<vmem>>, vector<128x16xf32>
    %cst_11 = arith.constant dense<0.000000e+00> : vector<128x256xf32>
    %16 = tpu.matmul %15, %14, %cst_11 {dimension_numbers = #tpu.dot_dimension_numbers<[1], [0], [0], [1], [0, 0, 1, 1], [], []>} : vector<128x16xf32>, vector<16x256xf32>, vector<128x256xf32> -> vector<128x256xf32>
    %c0_12 = arith.constant 0 : index
    %c0_13 = arith.constant 0 : index
    %17 = vector.load %arg6[%c0_12, %c0_13] : memref<128x1xf32, #tpu.memory_space<vmem>>, vector<128x1xf32>
    %18 = vector.broadcast %17 : vector<128x1xf32> to vector<128x256xf32>
    %19 = arith.addf %16, %18 : vector<128x256xf32>
    %20 = arith.addf %19, %1 : vector<128x256xf32>
    %c0_14 = arith.constant 0 : index
    %c0_15 = arith.constant 0 : index
    %c0_16 = arith.constant 0 : index
    %21 = vector.load %arg7[%c0_14, %c0_15, %c0_16] : memref<1x128x256xf32, #tpu.memory_space<vmem>>, vector<1x128x256xf32>
    %22 = vector.shape_cast %21 : vector<1x128x256xf32> to vector<128x256xf32>
    %23 = vector.shape_cast %20 : vector<128x256xf32> to vector<1x128x256xf32>
    tpu.vector_store %arg7[%c0_14, %c0_15, %c0_16], %23 {strides = array<i32>} : memref<1x128x256xf32, #tpu.memory_space<vmem>>, vector<1x128x256xf32>,
    return
  }
  func.func @transform_0(%arg0: i32, %arg1: i32) -> (i32, i32, i32) {
    %c0_i32 = arith.constant 0 : i32
    %c0_i32_0 = arith.constant 0 : i32
    return %arg0, %c0_i32, %arg1 : i32, i32, i32
  }
  func.func @transform_1(%arg0: i32, %arg1: i32) -> (i32, i32) {
    %c0_i32 = arith.constant 0 : i32
    %c0_i32_0 = arith.constant 0 : i32
    %c0_i32_1 = arith.constant 0 : i32
    return %c0_i32, %c0_i32_0 : i32, i32
  }
  func.func @transform_2(%arg0: i32, %arg1: i32) -> (i32, i32) {
    %c0_i32 = arith.constant 0 : i32
    %c0_i32_0 = arith.constant 0 : i32
    %c0_i32_1 = arith.constant 0 : i32
    return %c0_i32, %c0_i32_0 : i32, i32
  }
  func.func @transform_3(%arg0: i32, %arg1: i32) -> (i32, i32) {
    %c0_i32 = arith.constant 0 : i32
    %c0_i32_0 = arith.constant 0 : i32
    %c0_i32_1 = arith.constant 0 : i32
    return %c0_i32, %c0_i32_0 : i32, i32
  }
  func.func @transform_4(%arg0: i32, %arg1: i32) -> (i32, i32) {
    %c0_i32 = arith.constant 0 : i32
    %c0_i32_0 = arith.constant 0 : i32
    %c0_i32_1 = arith.constant 0 : i32
    return %c0_i32, %c0_i32_0 : i32, i32
  }
  func.func @transform_5(%arg0: i32, %arg1: i32) -> (i32, i32, i32) {
    %c0_i32 = arith.constant 0 : i32
    %c0_i32_0 = arith.constant 0 : i32
    return %arg0, %c0_i32, %arg1 : i32, i32, i32
  }
}

</mosaic_0001>

<llo_original>
// kernel: tpu_custom_call.1
$region0: #{tpu_custom_call.1}
  #allocation0 [shape = 'u32[]', space=smem, size = 0x4, offset = 0x4, fixed_abs, tag = 'smem constant byte address 0x4 - core index']
  #allocation1 [shape = 'u32[144,128]{1,0:T(1,128)}', space=vmem, size = 0x12000, scoped, tag = 'internal scratch']
  %s0 = inlined_call_operand.hbm [shape: f32[2,128,256], index: 0, kind: input, shape index: {}]
  %s1 = inlined_call_operand.vmem [shape: f32[16,128], index: 1, kind: input, shape index: {}]
  %s2 = inlined_call_operand.vmem [shape: f32[16,1], index: 2, kind: input, shape index: {}]
  %s3 = inlined_call_operand.vmem [shape: f32[128,16], index: 3, kind: input, shape index: {}]
  %s4 = inlined_call_operand.vmem [shape: f32[128,1], index: 4, kind: input, shape index: {}]
  %s5 = inlined_call_operand.hbm [shape: f32[2,128,256], index: 5, kind: output, shape index: {}]
  %s6 = sld [smem:[#allocation0]]
  $region57: #{tpu_custom_call.1} parent=0
    _
  %s8 = ssub.s32 1, %s6
  %s9 = scalar_select 0, %s8, %s6
  $region1: #{tpu_custom_call.1} parent=0
    #allocation2 [shape = 'u8[262144]{0}', space=vmem, size = 0x40000, scoped, tag = 'input window, operand 0']
    #allocation3 [shape = 's32[2]{0}', space=sflag, size = 0x8, scoped, tag = 'scoped memory for tpu_custom_call.1']
    #allocation4 [shape = 's32[2]{0}', space=sflag, size = 0x8, scoped, tag = 'scoped memory for tpu_custom_call.1']
    #allocation5 [shape = 'u8[262144]{0}', space=vmem, size = 0x40000, scoped, tag = 'output window, operand 0']
    %10 = vsyncpa [#allocation3], 0
    %s11 = scalar_lea.sflag [#allocation3], 1
    %12 = vsyncpa %s11, 0
    %13 = vsyncpa [#allocation4], 0
    %s14 = scalar_lea.sflag [#allocation4], 1
    %15 = vsyncpa %s14, 0
    loop: start=0, step=1, limit=4
    $region2: #{tpu_custom_call.1} parent=1 // loop_pre_header
      _
    $region3: #{tpu_custom_call.1} parent=1 // loop_header
      %s17 = sphi 0, %s21
      %p18 = scmp.ge.s32.totalorder %s17, 4
      %s24 = sphi 0, %s36
      %s25 = sphi 0, %s32
      %s26 = sphi 0, %s24
      %s27 = sphi 0, %s25
      %s28 = sphi 0, %s26
      %s29 = sphi 0, %s27
      %s41 = sphi 0, %s43
      %s44 = sphi 0, %s41
      %s45 = sphi 0, %s44
      %s61 = sphi 0, %s45
      %s65 = sphi 0, %s65
      %s67 = sphi 0, %s65
      %s68 = sphi 0, %s67
      %s82 = sphi 0, %s68
      %s86 = sphi 0, %s86
      %s88 = sphi 0, %s86
      %s89 = sphi 0, %s88
      %s103 = sphi 0, %s89
      %s107 = sphi 0, %s107
      %s109 = sphi 0, %s107
      %s110 = sphi 0, %s109
      %s124 = sphi 0, %s110
      %s128 = sphi 0, %s128
      %s130 = sphi 0, %s128
      %s131 = sphi 0, %s130
      %s145 = sphi 0, %s131
      %s153 = sphi 0, %s155
      %s156 = sphi 0, %s153
      %s157 = sphi 0, %s156
      %s173 = sphi 0, %s157
    $region4: #{tpu_custom_call.1} parent=1 // loop_header_branch
      %20 = sbr.rel (%p18) target = $region8
    $region5: #{tpu_custom_call.1} parent=1 // loop_body
      %s22 = ssub.s32 %s17, 1
      %s23 = ssub.s32 %s17, 2
      %s30 = sadd.s32 1, %s25
      %p31 = scmp.ge.s32.totalorder %s30, 1
      %s32 = scalar_select %p31, 0, %s30
      %s33 = sadd.s32 1, %s24
      %s34 = scalar_select %p31, %s33, %s24
      %p35 = scmp.ge.s32.totalorder %s34, 2
      %s36 = scalar_select %p35, 0, %s34
      %s37 = ssub.s32 %s24, %s36
      %s38 = ssub.s32 %s25, %s32
      %s39 = sor.u32 %s37, %s38
      %p40 = scmp.eq.s32.totalorder %s39, 0
      %s42 = sadd.s32 %s41, 1
      %s43 = scalar_select %p40, %s41, %s42
      %p46 = pneg %p40
      %p47 = scmp.eq.s32.totalorder %s17, 1
      %p48 = por %p46, %p47
      %p49 = scmp.ne.s32.totalorder %s41, %s44
      %p50 = scmp.eq.s32.totalorder %s17, 0
      %p51 = por %p49, %p50
      %p52 = scmp.ne.s32.totalorder %s41, %s44
      %p53 = scmp.eq.s32.totalorder %s22, 1
      %p54 = por %p52, %p53
      %p55 = scmp.ne.s32.totalorder %s44, %s45
      %p56 = scmp.eq.s32.totalorder %s22, 0
      %p57 = por %p55, %p56
      %p58 = scmp.ne.s32.totalorder %s44, %s45
      %p59 = scmp.eq.s32.totalorder %s23, 1
      %p60 = por %p58, %p59
      %p62 = scmp.ne.s32.totalorder %s45, %s61
      %p63 = scmp.eq.s32.totalorder %s23, 0
      %p64 = por %p62, %p63
      %s66 = sadd.s32 %s65, 1
      %p69 = scmp.eq.s32.totalorder %s17, 1
      %p70 = scmp.ne.s32.totalorder %s65, %s67
      %p71 = scmp.eq.s32.totalorder %s17, 0
      %p72 = por %p70, %p71
      %p73 = scmp.ne.s32.totalorder %s65, %s67
      %p74 = scmp.eq.s32.totalorder %s22, 1
      %p75 = por %p73, %p74
      %p76 = scmp.ne.s32.totalorder %s67, %s68
      %p77 = scmp.eq.s32.totalorder %s22, 0
      %p78 = por %p76, %p77
      %p79 = scmp.ne.s32.totalorder %s67, %s68
      %p80 = scmp.eq.s32.totalorder %s23, 1
      %p81 = por %p79, %p80
      %p83 = scmp.ne.s32.totalorder %s68, %s82
      %p84 = scmp.eq.s32.totalorder %s23, 0
      %p85 = por %p83, %p84
      %s87 = sadd.s32 %s86, 1
      %p90 = scmp.eq.s32.totalorder %s17, 1
      %p91 = scmp.ne.s32.totalorder %s86, %s88
      %p92 = scmp.eq.s32.totalorder %s17, 0
      %p93 = por %p91, %p92
      %p94 = scmp.ne.s32.totalorder %s86, %s88
      %p95 = scmp.eq.s32.totalorder %s22, 1
      %p96 = por %p94, %p95
      %p97 = scmp.ne.s32.totalorder %s88, %s89
      %p98 = scmp.eq.s32.totalorder %s22, 0
      %p99 = por %p97, %p98
      %p100 = scmp.ne.s32.totalorder %s88, %s89
      %p101 = scmp.eq.s32.totalorder %s23, 1
      %p102 = por %p100, %p101
      %p104 = scmp.ne.s32.totalorder %s89, %s103
      %p105 = scmp.eq.s32.totalorder %s23, 0
      %p106 = por %p104, %p105
      %s108 = sadd.s32 %s107, 1
      %p111 = scmp.eq.s32.totalorder %s17, 1
      %p112 = scmp.ne.s32.totalorder %s107, %s109
      %p113 = scmp.eq.s32.totalorder %s17, 0
      %p114 = por %p112, %p113
      %p115 = scmp.ne.s32.totalorder %s107, %s109
      %p116 = scmp.eq.s32.totalorder %s22, 1
      %p117 = por %p115, %p116
      %p118 = scmp.ne.s32.totalorder %s109, %s110
      %p119 = scmp.eq.s32.totalorder %s22, 0
      %p120 = por %p118, %p119
      %p121 = scmp.ne.s32.totalorder %s109, %s110
      %p122 = scmp.eq.s32.totalorder %s23, 1
      %p123 = por %p121, %p122
      %p125 = scmp.ne.s32.totalorder %s110, %s124
      %p126 = scmp.eq.s32.totalorder %s23, 0
      %p127 = por %p125, %p126
      %s129 = sadd.s32 %s128, 1
      %p132 = scmp.eq.s32.totalorder %s17, 1
      %p133 = scmp.ne.s32.totalorder %s128, %s130
      %p134 = scmp.eq.s32.totalorder %s17, 0
      %p135 = por %p133, %p134
      %p136 = scmp.ne.s32.totalorder %s128, %s130
      %p137 = scmp.eq.s32.totalorder %s22, 1
      %p138 = por %p136, %p137
      %p139 = scmp.ne.s32.totalorder %s130, %s131
      %p140 = scmp.eq.s32.totalorder %s22, 0
      %p141 = por %p139, %p140
      %p142 = scmp.ne.s32.totalorder %s130, %s131
      %p143 = scmp.eq.s32.totalorder %s23, 1
      %p144 = por %p142, %p143
      %p146 = scmp.ne.s32.totalorder %s131, %s145
      %p147 = scmp.eq.s32.totalorder %s23, 0
      %p148 = por %p146, %p147
      %s149 = ssub.s32 %s24, %s36
      %s150 = ssub.s32 %s25, %s32
      %s151 = sor.u32 %s149, %s150
      %p152 = scmp.eq.s32.totalorder %s151, 0
      %s154 = sadd.s32 %s153, 1
      %s155 = scalar_select %p152, %s153, %s154
      %p158 = pneg %p152
      %p159 = scmp.eq.s32.totalorder %s17, 1
      %p160 = por %p158, %p159
      %p161 = scmp.ne.s32.totalorder %s153, %s156
      %p162 = scmp.eq.s32.totalorder %s17, 0
      %p163 = por %p161, %p162
      %p164 = scmp.ne.s32.totalorder %s153, %s156
      %p165 = scmp.eq.s32.totalorder %s22, 1
      %p166 = por %p164, %p165
      %p167 = scmp.ne.s32.totalorder %s156, %s157
      %p168 = scmp.eq.s32.totalorder %s22, 0
      %p169 = por %p167, %p168
      %p170 = scmp.ne.s32.totalorder %s156, %s157
      %p171 = scmp.eq.s32.totalorder %s23, 1
      %p172 = por %p170, %p171
      %p174 = scmp.ne.s32.totalorder %s157, %s173
      %p175 = scmp.eq.s32.totalorder %s23, 0
      %p176 = por %p174, %p175
      %p177 = scmp.le.s32.totalorder 1, %s17
      %p178 = scmp.lt.s32.totalorder %s17, 3
      %p179 = pnand %p177, %p178
      %p180 = pneg %p179
      // Predicated region
      $region9: #{tpu_custom_call.1} parent=5 // pred_check
        _
      $region10: #{tpu_custom_call.1} parent=5 // pred_check_branch
        %182 = sbr.rel (%p179) target = $region12
      $region11: #{tpu_custom_call.1} parent=5 // pred_region
        %s183 = ssub.s32 %s17, 1
        // Predicated region
        $region13: #{tpu_custom_call.1} parent=11 // pred_check
          %p184 = pneg %p78
        $region14: #{tpu_custom_call.1} parent=11 // pred_check_branch
          %186 = sbr.rel (%p184) target = $region16
        $region15: #{tpu_custom_call.1} parent=11 // pred_region
          _
        $region16: #{tpu_custom_call.1} parent=11 // pred_fallthru
          _
        // Predicated region
        $region17: #{tpu_custom_call.1} parent=11 // pred_check
          %p187 = pneg %p99
        $region18: #{tpu_custom_call.1} parent=11 // pred_check_branch
          %189 = sbr.rel (%p187) target = $region20
        $region19: #{tpu_custom_call.1} parent=11 // pred_region
          _
        $region20: #{tpu_custom_call.1} parent=11 // pred_fallthru
          _
        // Predicated region
        $region21: #{tpu_custom_call.1} parent=11 // pred_check
          %p190 = pneg %p120
        $region22: #{tpu_custom_call.1} parent=11 // pred_check_branch
          %192 = sbr.rel (%p190) target = $region24
        $region23: #{tpu_custom_call.1} parent=11 // pred_region
          _
        $region24: #{tpu_custom_call.1} parent=11 // pred_fallthru
          _
        // Predicated region
        $region25: #{tpu_custom_call.1} parent=11 // pred_check
          %p193 = pneg %p141
        $region26: #{tpu_custom_call.1} parent=11 // pred_check_branch
          %195 = sbr.rel (%p193) target = $region28
        $region27: #{tpu_custom_call.1} parent=11 // pred_region
          _
        $region28: #{tpu_custom_call.1} parent=11 // pred_fallthru
          _
      $region12: #{tpu_custom_call.1} parent=5 // pred_fallthru
        _
      %p196 = scmp.lt.s32.totalorder %s17, 2
      // Predicated region
      $region29: #{tpu_custom_call.1} parent=5 // pred_check
        %p197 = pneg %p196
      $region30: #{tpu_custom_call.1} parent=5 // pred_check_branch
        %199 = sbr.rel (%p197) target = $region32
      $region31: #{tpu_custom_call.1} parent=5 // pred_region
        // Predicated region
        $region33: #{tpu_custom_call.1} parent=31 // pred_check
          %p200 = pneg %p51
        $region34: #{tpu_custom_call.1} parent=31 // pred_check_branch
          %202 = sbr.rel (%p200) target = $region36
        $region35: #{tpu_custom_call.1} parent=31 // pred_region
          %s203 = sand.u32 %s41, 1
          %s204 = scalar_lea.sflag [#allocation3], %s203
          %s205 = sand.u32 %s41, 1
          %s206 = smul.addr %s205, 256
          %s207 = scalar_lea.vmem [#allocation2], %s206
          %s208 = smul.u32 2, %s25
          %s210 = ssub.s32 4096, 4096
          %211 = vsyncadd %s204, %s210
          %s212 = smul.addr %s24, 32
          %s213 = sadd.s32 %s208, %s212
          %s214 = smul.addr %s213, 128
          %s215 = scalar_lea.hbm %s0, %s214
          %s216 = sshll.u32 %s207, 4
          %s217 = int_to_ptr.vmem [resolvable:$true] %s216
          %222 = dma.hbm_to_vmem [thread:$0]  %s215, 4096, %s217, %s204, 256, 256, 16
        $region36: #{tpu_custom_call.1} parent=31 // pred_fallthru
          _
      $region32: #{tpu_custom_call.1} parent=5 // pred_fallthru
        _
      %p223 = scmp.le.s32.totalorder 1, %s17
      %p224 = scmp.lt.s32.totalorder %s17, 3
      %p225 = pnand %p223, %p224
      %p226 = pneg %p225
      // Predicated region
      $region37: #{tpu_custom_call.1} parent=5 // pred_check
        _
      $region38: #{tpu_custom_call.1} parent=5 // pred_check_branch
        %228 = sbr.rel (%p225) target = $region40
      $region39: #{tpu_custom_call.1} parent=5 // pred_region
        %s229 = ssub.s32 %s17, 1
        %s230 = sand.u32 %s44, 1
        %s231 = scalar_lea.sflag [#allocation3], %s230
        %s232 = sand.u32 %s44, 1
        %s233 = smul.addr %s232, 256
        %s234 = scalar_lea.vmem [#allocation2], %s233
        // Predicated region
        $region41: #{tpu_custom_call.1} parent=39 // pred_check
          %p235 = pneg %p57
        $region42: #{tpu_custom_call.1} parent=39 // pred_check_branch
          %237 = sbr.rel (%p235) target = $region44
        $region43: #{tpu_custom_call.1} parent=39 // pred_region
          %238 = dma.done %s231, 4096
        $region44: #{tpu_custom_call.1} parent=39 // pred_fallthru
          _
        %s239 = sand.u32 %s44, 1
        %s240 = scalar_lea.sflag [#allocation3], %s239
        %s241 = sand.u32 %s44, 1
        %s242 = smul.addr %s241, 256
        %s243 = scalar_lea.vmem [#allocation2], %s242
        %p244 = pneg %p57
        %p245 = pneg %p54
        %p246 = pneg %p78
        %p247 = pneg %p75
        %p248 = pneg %p99
        %p249 = pneg %p96
        %p250 = pneg %p120
        %p251 = pneg %p117
        %p252 = pneg %p141
        %p253 = pneg %p138
        %p254 = pneg %p169
        %p255 = pneg %p166
        %s256 = sand.u32 %s156, 1
        %s257 = scalar_lea.sflag [#allocation4], %s256
        %s258 = sand.u32 %s156, 1
        %s259 = smul.addr %s258, 256
        %s260 = scalar_lea.vmem [#allocation5], %s259
        %s261 = smul.u32 2, %s27
        %s262 = smul.u32 2, %s27
        %v263 = vld [vmem:[%s234] sm:$0xff]
        %v264 = vld [vmem:[%s234 + $0x8] sm:$0xff]
        %v265 = vld [vmem:[%s234 + $0x10] sm:$0xff]
        %v266 = vld [vmem:[%s234 + $0x18] sm:$0xff]
        %v267 = vld [vmem:[%s234 + $0x20] sm:$0xff]
        %v268 = vld [vmem:[%s234 + $0x28] sm:$0xff]
        %v269 = vld [vmem:[%s234 + $0x30] sm:$0xff]
        %v270 = vld [vmem:[%s234 + $0x38] sm:$0xff]
        %v271 = vld [vmem:[%s234 + $0x40] sm:$0xff]
        %v272 = vld [vmem:[%s234 + $0x48] sm:$0xff]
        %v273 = vld [vmem:[%s234 + $0x50] sm:$0xff]
        %v274 = vld [vmem:[%s234 + $0x58] sm:$0xff]
        %v275 = vld [vmem:[%s234 + $0x60] sm:$0xff]
        %v276 = vld [vmem:[%s234 + $0x68] sm:$0xff]
        %v277 = vld [vmem:[%s234 + $0x70] sm:$0xff]
        %v278 = vld [vmem:[%s234 + $0x78] sm:$0xff]
        %v279 = vld [vmem:[%s234 + $0x80] sm:$0xff]
        %v280 = vld [vmem:[%s234 + $0x88] sm:$0xff]
        %v281 = vld [vmem:[%s234 + $0x90] sm:$0xff]
        %v282 = vld [vmem:[%s234 + $0x98] sm:$0xff]
        %v283 = vld [vmem:[%s234 + $0xa0] sm:$0xff]
        %v284 = vld [vmem:[%s234 + $0xa8] sm:$0xff]
        %v285 = vld [vmem:[%s234 + $0xb0] sm:$0xff]
        %v286 = vld [vmem:[%s234 + $0xb8] sm:$0xff]
        %v287 = vld [vmem:[%s234 + $0xc0] sm:$0xff]
        %v288 = vld [vmem:[%s234 + $0xc8] sm:$0xff]
        %v289 = vld [vmem:[%s234 + $0xd0] sm:$0xff]
        %v290 = vld [vmem:[%s234 + $0xd8] sm:$0xff]
        %v291 = vld [vmem:[%s234 + $0xe0] sm:$0xff]
        %v292 = vld [vmem:[%s234 + $0xe8] sm:$0xff]
        %v293 = vld [vmem:[%s234 + $0xf0] sm:$0xff]
        %v294 = vld [vmem:[%s234 + $0xf8] sm:$0xff]
        %v295 = vld [vmem:[%s1] sm:$0xff]
        %v296 = vld [vmem:[%s1 + $0x8] sm:$0xff]
        %v297 = vld [vmem:[%s2] sm:$0xff]
        %v298 = vld [vmem:[%s2 + $0x8] sm:$0xff]
        %300 = vset.pattern.permute.xlu0 0
        %301 = vperm.xlu0 %300, %v297
        %v302 = vpop.permute.xlu0 %301
        %305 = vset.pattern.permute.xlu0 0
        %306 = vperm.xlu0 %305, %v298
        %v307 = vpop.permute.xlu0 %306
        %309 = vmatprep.subr.mxu0 %v294
        %310 = vmatpush1.msra.mxu0 %v293
        %311 = vmatprep.subr.mxu0 %v292
        %312 = vmatpush1.msra.mxu0 %v291
        %313 = vmatprep.subr.mxu0 %v290
        %314 = vmatpush1.msra.mxu0 %v289
        %315 = vmatprep.subr.mxu0 %v288
        %316 = vmatpush1.msra.mxu0 %v287
        %317 = vmatprep.subr.mxu0 %v286
        %318 = vmatpush1.msra.mxu0 %v285
        %319 = vmatprep.subr.mxu0 %v284
        %320 = vmatpush1.msra.mxu0 %v283
        %321 = vmatprep.subr.mxu0 %v282
        %322 = vmatpush1.msra.mxu0 %v281
        %323 = vmatprep.subr.mxu0 %v280
        %324 = vmatpush1.msra.mxu0 %v279
        %325 = vmatprep.subr.mxu0 %v278
        %326 = vmatpush1.msra.mxu0 %v277
        %327 = vmatprep.subr.mxu0 %v276
        %328 = vmatpush1.msra.mxu0 %v275
        %329 = vmatprep.subr.mxu0 %v274
        %330 = vmatpush1.msra.mxu0 %v273
        %331 = vmatprep.subr.mxu0 %v272
        %332 = vmatpush1.msra.mxu0 %v271
        %333 = vmatprep.subr.mxu0 %v270
        %334 = vmatpush1.msra.mxu0 %v269
        %335 = vmatprep.subr.mxu0 %v268
        %336 = vmatpush1.msra.mxu0 %v267
        %337 = vmatprep.subr.mxu0 %v266
        %338 = vmatpush1.msra.mxu0 %v265
        %339 = vmatprep.subr.mxu0 %v264
        %340 = vmatpush1.msra.mxu0 %v263
        %341 = vmatprep.subr.mxu0 0.0
        %342 = vmatpush2.msra.mxu0 0.0
        %343 = vmatprep.subr.mxu0 0.0
        %344 = vmatpush2.msra.mxu0 0.0
        %345 = vmatprep.subr.mxu0 0.0
        %346 = vmatpush2.msra.mxu0 0.0
        %347 = vmatprep.subr.mxu0 0.0
        %348 = vmatpush2.msra.mxu0 0.0
        %349 = vmatprep.subr.mxu0 0.0
        %350 = vmatpush2.msra.mxu0 0.0
        %351 = vmatprep.subr.mxu0 0.0
        %352 = vmatpush2.msra.mxu0 0.0
        %353 = vmatprep.subr.mxu0 0.0
        %354 = vmatpush2.msra.mxu0 0.0
        %355 = vmatprep.subr.mxu0 0.0
        %356 = vmatpush2.msra.mxu0 0.0
        %357 = vmatprep.subr.mxu0 0.0
        %358 = vmatpush2.msra.mxu0 0.0
        %359 = vmatprep.subr.mxu0 0.0
        %360 = vmatpush2.msra.mxu0 0.0
        %361 = vmatprep.subr.mxu0 0.0
        %362 = vmatpush2.msra.mxu0 0.0
        %363 = vmatprep.subr.mxu0 0.0
        %364 = vmatpush2.msra.mxu0 0.0
        %365 = vmatprep.subr.mxu0 0.0
        %366 = vmatpush2.msra.mxu0 0.0
        %367 = vmatprep.subr.mxu0 0.0
        %368 = vmatpush2.msra.mxu0 0.0
        %369 = vmatprep.subr.mxu0 0.0
        %370 = vmatpush2.msra.mxu0 0.0
        %371 = vmatprep.subr.mxu0 0.0
        %372 = vmatpush2.msra.mxu0 0.0
        %373 = vmatprep.mubr.f32.mxu0 0.0
        %374 = vmatmul.mubr.f32.gmra.mxu0 %v295
        %v375 = vpop.f32.mrf.mxu0
        %v376 = vadd.f32 %v302, %v375
        %v377 = vpop.f32.mrf.mxu0
        %v378 = vadd.f32 %v302, %v377
        %379 = vmatprep.mubr.f32.mxu0 0.0
        %380 = vmatmul.mubr.f32.gmra.mxu0 %v296
        %v381 = vpop.f32.mrf.mxu0
        %v382 = vadd.f32 %v307, %v381
        %v383 = vpop.f32.mrf.mxu0
        %v384 = vadd.f32 %v307, %v383
        %385 = vdwg.mxu0
        %v386 = vmul.f32 %v376, 0.5
        %v387 = vmul.f32 %v378, 0.5
        %v388 = vmul.f32 %v382, 0.5
        %v389 = vmul.f32 %v384, 0.5
        %v390 = vmul.f32 %v376, 0.70710677
        %v391 = vmul.f32 %v378, 0.70710677
        %v392 = vmul.f32 %v382, 0.70710677
        %v393 = vmul.f32 %v384, 0.70710677
        %v394 = verf.f32.pop %v390
        %v395 = verf.f32.pop %v391
        %v396 = verf.f32.pop %v392
        %v397 = verf.f32.pop %v393
        %v398 = vadd.f32 %v394, 1.0
        %v399 = vadd.f32 %v395, 1.0
        %v400 = vadd.f32 %v396, 1.0
        %v401 = vadd.f32 %v397, 1.0
        %v402 = vmul.f32 %v386, %v398
        %v403 = vmul.f32 %v387, %v399
        %v404 = vmul.f32 %v388, %v400
        %v405 = vmul.f32 %v389, %v401
        %v406 = vld [vmem:[%s3] sm:$0xff]
        %v407 = vld [vmem:[%s3 + $0x8] sm:$0xff]
        %v408 = vld [vmem:[%s3 + $0x10] sm:$0xff]
        %v409 = vld [vmem:[%s3 + $0x18] sm:$0xff]
        %v410 = vld [vmem:[%s3 + $0x20] sm:$0xff]
        %v411 = vld [vmem:[%s3 + $0x28] sm:$0xff]
        %v412 = vld [vmem:[%s3 + $0x30] sm:$0xff]
        %v413 = vld [vmem:[%s3 + $0x38] sm:$0xff]
        %v414 = vld [vmem:[%s3 + $0x40] sm:$0xff]
        %v415 = vld [vmem:[%s3 + $0x48] sm:$0xff]
        %v416 = vld [vmem:[%s3 + $0x50] sm:$0xff]
        %v417 = vld [vmem:[%s3 + $0x58] sm:$0xff]
        %v418 = vld [vmem:[%s3 + $0x60] sm:$0xff]
        %v419 = vld [vmem:[%s3 + $0x68] sm:$0xff]
        %v420 = vld [vmem:[%s3 + $0x70] sm:$0xff]
        %v421 = vld [vmem:[%s3 + $0x78] sm:$0xff]
        %v422 = vld [vmem:[%s4] sm:$0xff]
        %v423 = vld [vmem:[%s4 + $0x8] sm:$0xff]
        %v424 = vld [vmem:[%s4 + $0x10] sm:$0xff]
        %v425 = vld [vmem:[%s4 + $0x18] sm:$0xff]
        %v426 = vld [vmem:[%s4 + $0x20] sm:$0xff]
        %v427 = vld [vmem:[%s4 + $0x28] sm:$0xff]
        %v428 = vld [vmem:[%s4 + $0x30] sm:$0xff]
        %v429 = vld [vmem:[%s4 + $0x38] sm:$0xff]
        %v430 = vld [vmem:[%s4 + $0x40] sm:$0xff]
        %v431 = vld [vmem:[%s4 + $0x48] sm:$0xff]
        %v432 = vld [vmem:[%s4 + $0x50] sm:$0xff]
        %v433 = vld [vmem:[%s4 + $0x58] sm:$0xff]
        %v434 = vld [vmem:[%s4 + $0x60] sm:$0xff]
        %v435 = vld [vmem:[%s4 + $0x68] sm:$0xff]
        %v436 = vld [vmem:[%s4 + $0x70] sm:$0xff]
        %v437 = vld [vmem:[%s4 + $0x78] sm:$0xff]
        %439 = vset.pattern.permute.xlu0 0
        %440 = vperm.xlu0 %439, %v422
        %v441 = vpop.permute.xlu0 %440
        %444 = vset.pattern.permute.xlu0 0
        %445 = vperm.xlu0 %444, %v423
        %v446 = vpop.permute.xlu0 %445
        %449 = vset.pattern.permute.xlu0 0
        %450 = vperm.xlu0 %449, %v424
        %v451 = vpop.permute.xlu0 %450
        %454 = vset.pattern.permute.xlu0 0
        %455 = vperm.xlu0 %454, %v425
        %v456 = vpop.permute.xlu0 %455
        %459 = vset.pattern.permute.xlu0 0
        %460 = vperm.xlu0 %459, %v426
        %v461 = vpop.permute.xlu0 %460
        %464 = vset.pattern.permute.xlu0 0
        %465 = vperm.xlu0 %464, %v427
        %v466 = vpop.permute.xlu0 %465
        %469 = vset.pattern.permute.xlu0 0
        %470 = vperm.xlu0 %469, %v428
        %v471 = vpop.permute.xlu0 %470
        %474 = vset.pattern.permute.xlu0 0
        %475 = vperm.xlu0 %474, %v429
        %v476 = vpop.permute.xlu0 %475
        %479 = vset.pattern.permute.xlu0 0
        %480 = vperm.xlu0 %479, %v430
        %v481 = vpop.permute.xlu0 %480
        %484 = vset.pattern.permute.xlu0 0
        %485 = vperm.xlu0 %484, %v431
        %v486 = vpop.permute.xlu0 %485
        %489 = vset.pattern.permute.xlu0 0
        %490 = vperm.xlu0 %489, %v432
        %v491 = vpop.permute.xlu0 %490
        %494 = vset.pattern.permute.xlu0 0
        %495 = vperm.xlu0 %494, %v433
        %v496 = vpop.permute.xlu0 %495
        %499 = vset.pattern.permute.xlu0 0
        %500 = vperm.xlu0 %499, %v434
        %v501 = vpop.permute.xlu0 %500
        %504 = vset.pattern.permute.xlu0 0
        %505 = vperm.xlu0 %504, %v435
        %v506 = vpop.permute.xlu0 %505
        %509 = vset.pattern.permute.xlu0 0
        %510 = vperm.xlu0 %509, %v436
        %v511 = vpop.permute.xlu0 %510
        %514 = vset.pattern.permute.xlu0 0
        %515 = vperm.xlu0 %514, %v437
        %v516 = vpop.permute.xlu0 %515
        %vm518 = vcmask 130048
        %v520 = vsel %vm518, %v406, 0
        %v523 = vsel %vm518, %v407, 0
        %v526 = vsel %vm518, %v408, 0
        %v529 = vsel %vm518, %v409, 0
        %v532 = vsel %vm518, %v410, 0
        %v535 = vsel %vm518, %v411, 0
        %v538 = vsel %vm518, %v412, 0
        %v541 = vsel %vm518, %v413, 0
        %v544 = vsel %vm518, %v414, 0
        %v547 = vsel %vm518, %v415, 0
        %v550 = vsel %vm518, %v416, 0
        %v553 = vsel %vm518, %v417, 0
        %v556 = vsel %vm518, %v418, 0
        %v559 = vsel %vm518, %v419, 0
        %v562 = vsel %vm518, %v420, 0
        %v565 = vsel %vm518, %v421, 0
        %567 = vmatprep.subr.mxu0 0.0
        %568 = vmatpush1.msra.mxu0 0.0
        %569 = vmatprep.subr.mxu0 0.0
        %570 = vmatpush1.msra.mxu0 0.0
        %571 = vmatprep.subr.mxu0 0.0
        %572 = vmatpush1.msra.mxu0 0.0
        %573 = vmatprep.subr.mxu0 0.0
        %574 = vmatpush1.msra.mxu0 0.0
        %575 = vmatprep.subr.mxu0 0.0
        %576 = vmatpush1.msra.mxu0 0.0
        %577 = vmatprep.subr.mxu0 0.0
        %578 = vmatpush1.msra.mxu0 0.0
        %579 = vmatprep.subr.mxu0 0.0
        %580 = vmatpush1.msra.mxu0 0.0
        %581 = vmatprep.subr.mxu0 0.0
        %582 = vmatpush1.msra.mxu0 0.0
        %583 = vmatprep.subr.mxu0 0.0
        %584 = vmatpush1.msra.mxu0 0.0
        %585 = vmatprep.subr.mxu0 0.0
        %586 = vmatpush1.msra.mxu0 0.0
        %587 = vmatprep.subr.mxu0 0.0
        %588 = vmatpush1.msra.mxu0 0.0
        %589 = vmatprep.subr.mxu0 0.0
        %590 = vmatpush1.msra.mxu0 0.0
        %591 = vmatprep.subr.mxu0 0.0
        %592 = vmatpush1.msra.mxu0 0.0
        %593 = vmatprep.subr.mxu0 0.0
        %594 = vmatpush1.msra.mxu0 0.0
        %595 = vmatprep.subr.mxu0 %v405
        %596 = vmatpush1.msra.mxu0 %v404
        %597 = vmatprep.subr.mxu0 %v403
        %598 = vmatpush1.msra.mxu0 %v402
        %599 = vmatprep.subr.mxu0 0.0
        %600 = vmatpush2.msra.mxu0 0.0
        %601 = vmatprep.subr.mxu0 0.0
        %602 = vmatpush2.msra.mxu0 0.0
        %603 = vmatprep.subr.mxu0 0.0
        %604 = vmatpush2.msra.mxu0 0.0
        %605 = vmatprep.subr.mxu0 0.0
        %606 = vmatpush2.msra.mxu0 0.0
        %607 = vmatprep.subr.mxu0 0.0
        %608 = vmatpush2.msra.mxu0 0.0
        %609 = vmatprep.subr.mxu0 0.0
        %610 = vmatpush2.msra.mxu0 0.0
        %611 = vmatprep.subr.mxu0 0.0
        %612 = vmatpush2.msra.mxu0 0.0
        %613 = vmatprep.subr.mxu0 0.0
        %614 = vmatpush2.msra.mxu0 0.0
        %615 = vmatprep.subr.mxu0 0.0
        %616 = vmatpush2.msra.mxu0 0.0
        %617 = vmatprep.subr.mxu0 0.0
        %618 = vmatpush2.msra.mxu0 0.0
        %619 = vmatprep.subr.mxu0 0.0
        %620 = vmatpush2.msra.mxu0 0.0
        %621 = vmatprep.subr.mxu0 0.0
        %622 = vmatpush2.msra.mxu0 0.0
        %623 = vmatprep.subr.mxu0 0.0
        %624 = vmatpush2.msra.mxu0 0.0
        %625 = vmatprep.subr.mxu0 0.0
        %626 = vmatpush2.msra.mxu0 0.0
        %627 = vmatprep.subr.mxu0 0.0
        %628 = vmatpush2.msra.mxu0 0.0
        %629 = vmatprep.subr.mxu0 0.0
        %630 = vmatpush2.msra.mxu0 0.0
        %631 = vmatprep.mubr.f32.mxu0 0.0
        %632 = vmatmul.mubr.f32.gmra.mxu0 %v520
        %v633 = vpop.f32.mrf.mxu0
        %v634 = vadd.f32 %v441, %v633
        %v635 = vpop.f32.mrf.mxu0
        %v636 = vadd.f32 %v441, %v635
        %637 = vmatprep.mubr.f32.mxu0 0.0
        %638 = vmatmul.mubr.f32.gmra.mxu0 %v523
        %v639 = vpop.f32.mrf.mxu0
        %v640 = vadd.f32 %v446, %v639
        %v641 = vpop.f32.mrf.mxu0
        %v642 = vadd.f32 %v446, %v641
        %643 = vmatprep.mubr.f32.mxu0 0.0
        %644 = vmatmul.mubr.f32.gmra.mxu0 %v526
        %v645 = vpop.f32.mrf.mxu0
        %v646 = vadd.f32 %v451, %v645
        %v647 = vpop.f32.mrf.mxu0
        %v648 = vadd.f32 %v451, %v647
        %649 = vmatprep.mubr.f32.mxu0 0.0
        %650 = vmatmul.mubr.f32.gmra.mxu0 %v529
        %v651 = vpop.f32.mrf.mxu0
        %v652 = vadd.f32 %v456, %v651
        %v653 = vpop.f32.mrf.mxu0
        %v654 = vadd.f32 %v456, %v653
        %655 = vmatprep.mubr.f32.mxu0 0.0
        %656 = vmatmul.mubr.f32.gmra.mxu0 %v532
        %v657 = vpop.f32.mrf.mxu0
        %v658 = vadd.f32 %v461, %v657
        %v659 = vpop.f32.mrf.mxu0
        %v660 = vadd.f32 %v461, %v659
        %661 = vmatprep.mubr.f32.mxu0 0.0
        %662 = vmatmul.mubr.f32.gmra.mxu0 %v535
        %v663 = vpop.f32.mrf.mxu0
        %v664 = vadd.f32 %v466, %v663
        %v665 = vpop.f32.mrf.mxu0
        %v666 = vadd.f32 %v466, %v665
        %667 = vmatprep.mubr.f32.mxu0 0.0
        %668 = vmatmul.mubr.f32.gmra.mxu0 %v538
        %v669 = vpop.f32.mrf.mxu0
        %v670 = vadd.f32 %v471, %v669
        %v671 = vpop.f32.mrf.mxu0
        %v672 = vadd.f32 %v471, %v671
        %673 = vmatprep.mubr.f32.mxu0 0.0
        %674 = vmatmul.mubr.f32.gmra.mxu0 %v541
        %v675 = vpop.f32.mrf.mxu0
        %v676 = vadd.f32 %v476, %v675
        %v677 = vpop.f32.mrf.mxu0
        %v678 = vadd.f32 %v476, %v677
        %679 = vmatprep.mubr.f32.mxu0 0.0
        %680 = vmatmul.mubr.f32.gmra.mxu0 %v544
        %v681 = vpop.f32.mrf.mxu0
        %v682 = vadd.f32 %v481, %v681
        %v683 = vpop.f32.mrf.mxu0
        %v684 = vadd.f32 %v481, %v683
        %685 = vmatprep.mubr.f32.mxu0 0.0
        %686 = vmatmul.mubr.f32.gmra.mxu0 %v547
        %v687 = vpop.f32.mrf.mxu0
        %v688 = vadd.f32 %v486, %v687
        %v689 = vpop.f32.mrf.mxu0
        %v690 = vadd.f32 %v486, %v689
        %691 = vmatprep.mubr.f32.mxu0 0.0
        %692 = vmatmul.mubr.f32.gmra.mxu0 %v550
        %v693 = vpop.f32.mrf.mxu0
        %v694 = vadd.f32 %v491, %v693
        %v695 = vpop.f32.mrf.mxu0
        %v696 = vadd.f32 %v491, %v695
        %697 = vmatprep.mubr.f32.mxu0 0.0
        %698 = vmatmul.mubr.f32.gmra.mxu0 %v553
        %v699 = vpop.f32.mrf.mxu0
        %v700 = vadd.f32 %v496, %v699
        %v701 = vpop.f32.mrf.mxu0
        %v702 = vadd.f32 %v496, %v701
        %703 = vmatprep.mubr.f32.mxu0 0.0
        %704 = vmatmul.mubr.f32.gmra.mxu0 %v556
        %v705 = vpop.f32.mrf.mxu0
        %v706 = vadd.f32 %v501, %v705
        %v707 = vpop.f32.mrf.mxu0
        %v708 = vadd.f32 %v501, %v707
        %709 = vmatprep.mubr.f32.mxu0 0.0
        %710 = vmatmul.mubr.f32.gmra.mxu0 %v559
        %v711 = vpop.f32.mrf.mxu0
        %v712 = vadd.f32 %v506, %v711
        %v713 = vpop.f32.mrf.mxu0
        %v714 = vadd.f32 %v506, %v713
        %715 = vmatprep.mubr.f32.mxu0 0.0
        %716 = vmatmul.mubr.f32.gmra.mxu0 %v562
        %v717 = vpop.f32.mrf.mxu0
        %v718 = vadd.f32 %v511, %v717
        %v719 = vpop.f32.mrf.mxu0
        %v720 = vadd.f32 %v511, %v719
        %721 = vmatprep.mubr.f32.mxu0 0.0
        %722 = vmatmul.mubr.f32.gmra.mxu0 %v565
        %v723 = vpop.f32.mrf.mxu0
        %v724 = vadd.f32 %v516, %v723
        %v725 = vpop.f32.mrf.mxu0
        %v726 = vadd.f32 %v516, %v725
        %727 = vdwg.mxu0
        %v728 = vadd.f32 %v634, %v263
        %v729 = vadd.f32 %v636, %v264
        %v730 = vadd.f32 %v640, %v265
        %v731 = vadd.f32 %v642, %v266
        %v732 = vadd.f32 %v646, %v267
        %v733 = vadd.f32 %v648, %v268
        %v734 = vadd.f32 %v652, %v269
        %v735 = vadd.f32 %v654, %v270
        %v736 = vadd.f32 %v658, %v271
        %v737 = vadd.f32 %v660, %v272
        %v738 = vadd.f32 %v664, %v273
        %v739 = vadd.f32 %v666, %v274
        %v740 = vadd.f32 %v670, %v275
        %v741 = vadd.f32 %v672, %v276
        %v742 = vadd.f32 %v676, %v277
        %v743 = vadd.f32 %v678, %v278
        %v744 = vadd.f32 %v682, %v279
        %v745 = vadd.f32 %v684, %v280
        %v746 = vadd.f32 %v688, %v281
        %v747 = vadd.f32 %v690, %v282
        %v748 = vadd.f32 %v694, %v283
        %v749 = vadd.f32 %v696, %v284
        %v750 = vadd.f32 %v700, %v285
        %v751 = vadd.f32 %v702, %v286
        %v752 = vadd.f32 %v706, %v287
        %v753 = vadd.f32 %v708, %v288
        %v754 = vadd.f32 %v712, %v289
        %v755 = vadd.f32 %v714, %v290
        %v756 = vadd.f32 %v718, %v291
        %v757 = vadd.f32 %v720, %v292
        %v758 = vadd.f32 %v724, %v293
        %v759 = vadd.f32 %v726, %v294
        %760 = vst [vmem:[%s260] sm:$0xff] %v728
        %761 = vst [vmem:[%s260 + $0x8] sm:$0xff] %v729
        %762 = vst [vmem:[%s260 + $0x10] sm:$0xff] %v730
        %763 = vst [vmem:[%s260 + $0x18] sm:$0xff] %v731
        %764 = vst [vmem:[%s260 + $0x20] sm:$0xff] %v732
        %765 = vst [vmem:[%s260 + $0x28] sm:$0xff] %v733
        %766 = vst [vmem:[%s260 + $0x30] sm:$0xff] %v734
        %767 = vst [vmem:[%s260 + $0x38] sm:$0xff] %v735
        %768 = vst [vmem:[%s260 + $0x40] sm:$0xff] %v736
        %769 = vst [vmem:[%s260 + $0x48] sm:$0xff] %v737
        %770 = vst [vmem:[%s260 + $0x50] sm:$0xff] %v738
        %771 = vst [vmem:[%s260 + $0x58] sm:$0xff] %v739
        %772 = vst [vmem:[%s260 + $0x60] sm:$0xff] %v740
        %773 = vst [vmem:[%s260 + $0x68] sm:$0xff] %v741
        %774 = vst [vmem:[%s260 + $0x70] sm:$0xff] %v742
        %775 = vst [vmem:[%s260 + $0x78] sm:$0xff] %v743
        %776 = vst [vmem:[%s260 + $0x80] sm:$0xff] %v744
        %777 = vst [vmem:[%s260 + $0x88] sm:$0xff] %v745
        %778 = vst [vmem:[%s260 + $0x90] sm:$0xff] %v746
        %779 = vst [vmem:[%s260 + $0x98] sm:$0xff] %v747
        %780 = vst [vmem:[%s260 + $0xa0] sm:$0xff] %v748
        %781 = vst [vmem:[%s260 + $0xa8] sm:$0xff] %v749
        %782 = vst [vmem:[%s260 + $0xb0] sm:$0xff] %v750
        %783 = vst [vmem:[%s260 + $0xb8] sm:$0xff] %v751
        %784 = vst [vmem:[%s260 + $0xc0] sm:$0xff] %v752
        %785 = vst [vmem:[%s260 + $0xc8] sm:$0xff] %v753
        %786 = vst [vmem:[%s260 + $0xd0] sm:$0xff] %v754
        %787 = vst [vmem:[%s260 + $0xd8] sm:$0xff] %v755
        %788 = vst [vmem:[%s260 + $0xe0] sm:$0xff] %v756
        %789 = vst [vmem:[%s260 + $0xe8] sm:$0xff] %v757
        %790 = vst [vmem:[%s260 + $0xf0] sm:$0xff] %v758
        %791 = vst [vmem:[%s260 + $0xf8] sm:$0xff] %v759
        %s792 = sand.u32 %s156, 1
        %s793 = scalar_lea.sflag [#allocation4], %s792
        %s794 = sand.u32 %s156, 1
        %s795 = smul.addr %s794, 256
        %s796 = scalar_lea.vmem [#allocation5], %s795
        // Predicated region
        $region45: #{tpu_custom_call.1} parent=39 // pred_check
          %p797 = pneg %p166
        $region46: #{tpu_custom_call.1} parent=39 // pred_check_branch
          %799 = sbr.rel (%p797) target = $region48
        $region47: #{tpu_custom_call.1} parent=39 // pred_region
          %s800 = smul.u32 2, %s27
          %s802 = ssub.s32 4096, 4096
          %803 = vsyncadd %s793, %s802
          %s804 = smul.addr %s26, 32
          %s805 = sadd.s32 %s800, %s804
          %s806 = smul.addr %s805, 128
          %s807 = scalar_lea.hbm %s5, %s806
          %s808 = sshll.u32 %s796, 4
          %s809 = int_to_ptr.vmem [resolvable:$true] %s808
          %814 = dma.vmem_to_hbm [thread:$0]  %s809, 4096, %s807, %s793, 256, 256, 16
        $region48: #{tpu_custom_call.1} parent=39 // pred_fallthru
          _
      $region40: #{tpu_custom_call.1} parent=5 // pred_fallthru
        _
      %p815 = scmp.le.s32.totalorder 2, %s17
      // Predicated region
      $region49: #{tpu_custom_call.1} parent=5 // pred_check
        %p816 = pneg %p815
      $region50: #{tpu_custom_call.1} parent=5 // pred_check_branch
        %818 = sbr.rel (%p816) target = $region52
      $region51: #{tpu_custom_call.1} parent=5 // pred_region
        %s819 = ssub.s32 %s17, 2
        // Predicated region
        $region53: #{tpu_custom_call.1} parent=51 // pred_check
          %p820 = pneg %p172
        $region54: #{tpu_custom_call.1} parent=51 // pred_check_branch
          %822 = sbr.rel (%p820) target = $region56
        $region55: #{tpu_custom_call.1} parent=51 // pred_region
          %s823 = sand.u32 %s157, 1
          %s824 = scalar_lea.sflag [#allocation4], %s823
          %s825 = sand.u32 %s157, 1
          %s826 = smul.addr %s825, 256
          %s827 = scalar_lea.vmem [#allocation5], %s826
          %828 = dma.done %s824, 4096
        $region56: #{tpu_custom_call.1} parent=51 // pred_fallthru
          _
      $region52: #{tpu_custom_call.1} parent=5 // pred_fallthru
        _
    $region6: #{tpu_custom_call.1} parent=1 // loop_footer
      %s21 = sadd.s32 1, %s17
    $region7: #{tpu_custom_call.1} parent=1 // loop_footer_branch
      %16 = sbr.rel target = $region3
    $region8: #{tpu_custom_call.1} parent=1 // loop_exit
      _
    %829 = vsyncpa [#allocation3], 1
    %s830 = scalar_lea.sflag [#allocation3], 1
    %831 = vsyncpa %s830, 1
    %832 = vsyncpa [#allocation4], 1
    %s833 = scalar_lea.sflag [#allocation4], 1
    %834 = vsyncpa %s833, 1

// kernel: tpu_custom_call.1
$region0: #{tpu_custom_call.1}
  #allocation0 [shape = 'u32[]', space=smem, size = 0x4, offset = 0x4, fixed_abs, tag = 'smem constant byte address 0x4 - core index']
  #allocation1 [shape = 'u32[144,128]{1,0:T(1,128)}', space=vmem, size = 0x12000, scoped, tag = 'internal scratch']
  %s0 = inlined_call_operand.hbm [shape: f32[2,128,256], index: 0, kind: input, shape index: {}]
  %s1 = inlined_call_operand.vmem [shape: f32[16,128], index: 1, kind: input, shape index: {}]
  %s2 = inlined_call_operand.vmem [shape: f32[16,1], index: 2, kind: input, shape index: {}]
  %s3 = inlined_call_operand.vmem [shape: f32[128,16], index: 3, kind: input, shape index: {}]
  %s4 = inlined_call_operand.vmem [shape: f32[128,1], index: 4, kind: input, shape index: {}]
  %s5 = inlined_call_operand.hbm [shape: f32[2,128,256], index: 5, kind: output, shape index: {}]
  %s6 = sld [smem:[#allocation0]]
  $region57: #{tpu_custom_call.1} parent=0
    _
  %s8 = ssub.s32 1, %s6
  %s9 = scalar_select 0, %s8, %s6
  $region1: #{tpu_custom_call.1} parent=0
    #allocation2 [shape = 'u8[262144]{0}', space=vmem, size = 0x40000, scoped, tag = 'input window, operand 0']
    #allocation3 [shape = 's32[2]{0}', space=sflag, size = 0x8, scoped, tag = 'scoped memory for tpu_custom_call.1']
    #allocation4 [shape = 's32[2]{0}', space=sflag, size = 0x8, scoped, tag = 'scoped memory for tpu_custom_call.1']
    #allocation5 [shape = 'u8[262144]{0}', space=vmem, size = 0x40000, scoped, tag = 'output window, operand 0']
    %10 = vsyncpa [#allocation3], 0
    %s11 = scalar_lea.sflag [#allocation3], 1
    %12 = vsyncpa %s11, 0
    %13 = vsyncpa [#allocation4], 0
    %s14 = scalar_lea.sflag [#allocation4], 1
    %15 = vsyncpa %s14, 0
    loop: start=0, step=1, limit=4
    $region2: #{tpu_custom_call.1} parent=1 // loop_pre_header
      _
    $region3: #{tpu_custom_call.1} parent=1 // loop_header
      %s17 = sphi 0, %s21
      %p18 = scmp.ge.s32.totalorder %s17, 4
      %s24 = sphi 0, %s36
      %s25 = sphi 0, %s32
      %s26 = sphi 0, %s24
      %s27 = sphi 0, %s25
      %s28 = sphi 0, %s26
      %s29 = sphi 0, %s27
      %s41 = sphi 0, %s43
      %s44 = sphi 0, %s41
      %s45 = sphi 0, %s44
      %s61 = sphi 0, %s45
      %s65 = sphi 0, %s65
      %s67 = sphi 0, %s65
      %s68 = sphi 0, %s67
      %s82 = sphi 0, %s68
      %s86 = sphi 0, %s86
      %s88 = sphi 0, %s86
      %s89 = sphi 0, %s88
      %s103 = sphi 0, %s89
      %s107 = sphi 0, %s107
      %s109 = sphi 0, %s107
      %s110 = sphi 0, %s109
      %s124 = sphi 0, %s110
      %s128 = sphi 0, %s128
      %s130 = sphi 0, %s128
      %s131 = sphi 0, %s130
      %s145 = sphi 0, %s131
      %s153 = sphi 0, %s155
      %s156 = sphi 0, %s153
      %s157 = sphi 0, %s156
      %s173 = sphi 0, %s157
    $region4: #{tpu_custom_call.1} parent=1 // loop_header_branch
      %20 = sbr.rel (%p18) target = $region8
    $region5: #{tpu_custom_call.1} parent=1 // loop_body
      %s22 = ssub.s32 %s17, 1
      %s23 = ssub.s32 %s17, 2
      %s30 = sadd.s32 1, %s25
      %p31 = scmp.ge.s32.totalorder %s30, 1
      %s32 = scalar_select %p31, 0, %s30
      %s33 = sadd.s32 1, %s24
      %s34 = scalar_select %p31, %s33, %s24
      %p35 = scmp.ge.s32.totalorder %s34, 2
      %s36 = scalar_select %p35, 0, %s34
      %s37 = ssub.s32 %s24, %s36
      %s38 = ssub.s32 %s25, %s32
      %s39 = sor.u32 %s37, %s38
      %p40 = scmp.eq.s32.totalorder %s39, 0
      %s42 = sadd.s32 %s41, 1
      %s43 = scalar_select %p40, %s41, %s42
      %p46 = pneg %p40
      %p47 = scmp.eq.s32.totalorder %s17, 1
      %p48 = por %p46, %p47
      %p49 = scmp.ne.s32.totalorder %s41, %s44
      %p50 = scmp.eq.s32.totalorder %s17, 0
      %p51 = por %p49, %p50
      %p52 = scmp.ne.s32.totalorder %s41, %s44
      %p53 = scmp.eq.s32.totalorder %s22, 1
      %p54 = por %p52, %p53
      %p55 = scmp.ne.s32.totalorder %s44, %s45
      %p56 = scmp.eq.s32.totalorder %s22, 0
      %p57 = por %p55, %p56
      %p58 = scmp.ne.s32.totalorder %s44, %s45
      %p59 = scmp.eq.s32.totalorder %s23, 1
      %p60 = por %p58, %p59
      %p62 = scmp.ne.s32.totalorder %s45, %s61
      %p63 = scmp.eq.s32.totalorder %s23, 0
      %p64 = por %p62, %p63
      %s66 = sadd.s32 %s65, 1
      %p69 = scmp.eq.s32.totalorder %s17, 1
      %p70 = scmp.ne.s32.totalorder %s65, %s67
      %p71 = scmp.eq.s32.totalorder %s17, 0
      %p72 = por %p70, %p71
      %p73 = scmp.ne.s32.totalorder %s65, %s67
      %p74 = scmp.eq.s32.totalorder %s22, 1
      %p75 = por %p73, %p74
      %p76 = scmp.ne.s32.totalorder %s67, %s68
      %p77 = scmp.eq.s32.totalorder %s22, 0
      %p78 = por %p76, %p77
      %p79 = scmp.ne.s32.totalorder %s67, %s68
      %p80 = scmp.eq.s32.totalorder %s23, 1
      %p81 = por %p79, %p80
      %p83 = scmp.ne.s32.totalorder %s68, %s82
      %p84 = scmp.eq.s32.totalorder %s23, 0
      %p85 = por %p83, %p84
      %s87 = sadd.s32 %s86, 1
      %p90 = scmp.eq.s32.totalorder %s17, 1
      %p91 = scmp.ne.s32.totalorder %s86, %s88
      %p92 = scmp.eq.s32.totalorder %s17, 0
      %p93 = por %p91, %p92
      %p94 = scmp.ne.s32.totalorder %s86, %s88
      %p95 = scmp.eq.s32.totalorder %s22, 1
      %p96 = por %p94, %p95
      %p97 = scmp.ne.s32.totalorder %s88, %s89
      %p98 = scmp.eq.s32.totalorder %s22, 0
      %p99 = por %p97, %p98
      %p100 = scmp.ne.s32.totalorder %s88, %s89
      %p101 = scmp.eq.s32.totalorder %s23, 1
      %p102 = por %p100, %p101
      %p104 = scmp.ne.s32.totalorder %s89, %s103
      %p105 = scmp.eq.s32.totalorder %s23, 0
      %p106 = por %p104, %p105
      %s108 = sadd.s32 %s107, 1
      %p111 = scmp.eq.s32.totalorder %s17, 1
      %p112 = scmp.ne.s32.totalorder %s107, %s109
      %p113 = scmp.eq.s32.totalorder %s17, 0
      %p114 = por %p112, %p113
      %p115 = scmp.ne.s32.totalorder %s107, %s109
      %p116 = scmp.eq.s32.totalorder %s22, 1
      %p117 = por %p115, %p116
      %p118 = scmp.ne.s32.totalorder %s109, %s110
      %p119 = scmp.eq.s32.totalorder %s22, 0
      %p120 = por %p118, %p119
      %p121 = scmp.ne.s32.totalorder %s109, %s110
      %p122 = scmp.eq.s32.totalorder %s23, 1
      %p123 = por %p121, %p122
      %p125 = scmp.ne.s32.totalorder %s110, %s124
      %p126 = scmp.eq.s32.totalorder %s23, 0
      %p127 = por %p125, %p126
      %s129 = sadd.s32 %s128, 1
      %p132 = scmp.eq.s32.totalorder %s17, 1
      %p133 = scmp.ne.s32.totalorder %s128, %s130
      %p134 = scmp.eq.s32.totalorder %s17, 0
      %p135 = por %p133, %p134
      %p136 = scmp.ne.s32.totalorder %s128, %s130
      %p137 = scmp.eq.s32.totalorder %s22, 1
      %p138 = por %p136, %p137
      %p139 = scmp.ne.s32.totalorder %s130, %s131
      %p140 = scmp.eq.s32.totalorder %s22, 0
      %p141 = por %p139, %p140
      %p142 = scmp.ne.s32.totalorder %s130, %s131
      %p143 = scmp.eq.s32.totalorder %s23, 1
      %p144 = por %p142, %p143
      %p146 = scmp.ne.s32.totalorder %s131, %s145
      %p147 = scmp.eq.s32.totalorder %s23, 0
      %p148 = por %p146, %p147
      %s149 = ssub.s32 %s24, %s36
      %s150 = ssub.s32 %s25, %s32
      %s151 = sor.u32 %s149, %s150
      %p152 = scmp.eq.s32.totalorder %s151, 0
      %s154 = sadd.s32 %s153, 1
      %s155 = scalar_select %p152, %s153, %s154
      %p158 = pneg %p152
      %p159 = scmp.eq.s32.totalorder %s17, 1
      %p160 = por %p158, %p159
      %p161 = scmp.ne.s32.totalorder %s153, %s156
      %p162 = scmp.eq.s32.totalorder %s17, 0
      %p163 = por %p161, %p162
      %p164 = scmp.ne.s32.totalorder %s153, %s156
      %p165 = scmp.eq.s32.totalorder %s22, 1
      %p166 = por %p164, %p165
      %p167 = scmp.ne.s32.totalorder %s156, %s157
      %p168 = scmp.eq.s32.totalorder %s22, 0
      %p169 = por %p167, %p168
      %p170 = scmp.ne.s32.totalorder %s156, %s157
      %p171 = scmp.eq.s32.totalorder %s23, 1
      %p172 = por %p170, %p171
      %p174 = scmp.ne.s32.totalorder %s157, %s173
      %p175 = scmp.eq.s32.totalorder %s23, 0
      %p176 = por %p174, %p175
      %p177 = scmp.le.s32.totalorder 1, %s17
      %p178 = scmp.lt.s32.totalorder %s17, 3
      %p179 = pnand %p177, %p178
      %p180 = pneg %p179
      // Predicated region
      $region9: #{tpu_custom_call.1} parent=5 // pred_check
        _
      $region10: #{tpu_custom_call.1} parent=5 // pred_check_branch
        %182 = sbr.rel (%p179) target = $region12
      $region11: #{tpu_custom_call.1} parent=5 // pred_region
        %s183 = ssub.s32 %s17, 1
        // Predicated region
        $region13: #{tpu_custom_call.1} parent=11 // pred_check
          %p184 = pneg %p78
        $region14: #{tpu_custom_call.1} parent=11 // pred_check_branch
          %186 = sbr.rel (%p184) target = $region16
        $region15: #{tpu_custom_call.1} parent=11 // pred_region
          _
        $region16: #{tpu_custom_call.1} parent=11 // pred_fallthru
          _
        // Predicated region
        $region17: #{tpu_custom_call.1} parent=11 // pred_check
          %p187 = pneg %p99
        $region18: #{tpu_custom_call.1} parent=11 // pred_check_branch
          %189 = sbr.rel (%p187) target = $region20
        $region19: #{tpu_custom_call.1} parent=11 // pred_region
          _
        $region20: #{tpu_custom_call.1} parent=11 // pred_fallthru
          _
        // Predicated region
        $region21: #{tpu_custom_call.1} parent=11 // pred_check
          %p190 = pneg %p120
        $region22: #{tpu_custom_call.1} parent=11 // pred_check_branch
          %192 = sbr.rel (%p190) target = $region24
        $region23: #{tpu_custom_call.1} parent=11 // pred_region
          _
        $region24: #{tpu_custom_call.1} parent=11 // pred_fallthru
          _
        // Predicated region
        $region25: #{tpu_custom_call.1} parent=11 // pred_check
          %p193 = pneg %p141
        $region26: #{tpu_custom_call.1} parent=11 // pred_check_branch
          %195 = sbr.rel (%p193) target = $region28
        $region27: #{tpu_custom_call.1} parent=11 // pred_region
          _
        $region28: #{tpu_custom_call.1} parent=11 // pred_fallthru
          _
      $region12: #{tpu_custom_call.1} parent=5 // pred_fallthru
        _
      %p196 = scmp.lt.s32.totalorder %s17, 2
      // Predicated region
      $region29: #{tpu_custom_call.1} parent=5 // pred_check
        %p197 = pneg %p196
      $region30: #{tpu_custom_call.1} parent=5 // pred_check_branch
        %199 = sbr.rel (%p197) target = $region32
      $region31: #{tpu_custom_call.1} parent=5 // pred_region
        // Predicated region
        $region33: #{tpu_custom_call.1} parent=31 // pred_check
          %p200 = pneg %p51
        $region34: #{tpu_custom_call.1} parent=31 // pred_check_branch
          %202 = sbr.rel (%p200) target = $region36
        $region35: #{tpu_custom_call.1} parent=31 // pred_region
          %s203 = sand.u32 %s41, 1
          %s204 = scalar_lea.sflag [#allocation3], %s203
          %s205 = sand.u32 %s41, 1
          %s206 = smul.addr %s205, 256
          %s207 = scalar_lea.vmem [#allocation2], %s206
          %s208 = smul.u32 2, %s25
          %s210 = ssub.s32 4096, 4096
          %211 = vsyncadd %s204, %s210
          %s212 = smul.addr %s24, 32
          %s213 = sadd.s32 %s208, %s212
          %s214 = smul.addr %s213, 128
          %s215 = scalar_lea.hbm %s0, %s214
          %s216 = sshll.u32 %s207, 4
          %s217 = int_to_ptr.vmem [resolvable:$true] %s216
          %222 = dma.hbm_to_vmem [thread:$0]  %s215, 4096, %s217, %s204, 256, 256, 16
        $region36: #{tpu_custom_call.1} parent=31 // pred_fallthru
          _
      $region32: #{tpu_custom_call.1} parent=5 // pred_fallthru
        _
      %p223 = scmp.le.s32.totalorder 1, %s17
      %p224 = scmp.lt.s32.totalorder %s17, 3
      %p225 = pnand %p223, %p224
      %p226 = pneg %p225
      // Predicated region
      $region37: #{tpu_custom_call.1} parent=5 // pred_check
        _
      $region38: #{tpu_custom_call.1} parent=5 // pred_check_branch
        %228 = sbr.rel (%p225) target = $region40
      $region39: #{tpu_custom_call.1} parent=5 // pred_region
        %s229 = ssub.s32 %s17, 1
        %s230 = sand.u32 %s44, 1
        %s231 = scalar_lea.sflag [#allocation3], %s230
        %s232 = sand.u32 %s44, 1
        %s233 = smul.addr %s232, 256
        %s234 = scalar_lea.vmem [#allocation2], %s233
        // Predicated region
        $region41: #{tpu_custom_call.1} parent=39 // pred_check
          %p235 = pneg %p57
        $region42: #{tpu_custom_call.1} parent=39 // pred_check_branch
          %237 = sbr.rel (%p235) target = $region44
        $region43: #{tpu_custom_call.1} parent=39 // pred_region
          %238 = dma.done %s231, 4096
        $region44: #{tpu_custom_call.1} parent=39 // pred_fallthru
          _
        %s239 = sand.u32 %s44, 1
        %s240 = scalar_lea.sflag [#allocation3], %s239
        %s241 = sand.u32 %s44, 1
        %s242 = smul.addr %s241, 256
        %s243 = scalar_lea.vmem [#allocation2], %s242
        %p244 = pneg %p57
        %p245 = pneg %p54
        %p246 = pneg %p78
        %p247 = pneg %p75
        %p248 = pneg %p99
        %p249 = pneg %p96
        %p250 = pneg %p120
        %p251 = pneg %p117
        %p252 = pneg %p141
        %p253 = pneg %p138
        %p254 = pneg %p169
        %p255 = pneg %p166
        %s256 = sand.u32 %s156, 1
        %s257 = scalar_lea.sflag [#allocation4], %s256
        %s258 = sand.u32 %s156, 1
        %s259 = smul.addr %s258, 256
        %s260 = scalar_lea.vmem [#allocation5], %s259
        %s261 = smul.u32 2, %s27
        %s262 = smul.u32 2, %s27
        %v263 = vld [vmem:[%s234] sm:$0xff]
        %v264 = vld [vmem:[%s234 + $0x8] sm:$0xff]
        %v265 = vld [vmem:[%s234 + $0x10] sm:$0xff]
        %v266 = vld [vmem:[%s234 + $0x18] sm:$0xff]
        %v267 = vld [vmem:[%s234 + $0x20] sm:$0xff]
        %v268 = vld [vmem:[%s234 + $0x28] sm:$0xff]
        %v269 = vld [vmem:[%s234 + $0x30] sm:$0xff]
        %v270 = vld [vmem:[%s234 + $0x38] sm:$0xff]
        %v271 = vld [vmem:[%s234 + $0x40] sm:$0xff]
        %v272 = vld [vmem:[%s234 + $0x48] sm:$0xff]
        %v273 = vld [vmem:[%s234 + $0x50] sm:$0xff]
        %v274 = vld [vmem:[%s234 + $0x58] sm:$0xff]
        %v275 = vld [vmem:[%s234 + $0x60] sm:$0xff]
        %v276 = vld [vmem:[%s234 + $0x68] sm:$0xff]
        %v277 = vld [vmem:[%s234 + $0x70] sm:$0xff]
        %v278 = vld [vmem:[%s234 + $0x78] sm:$0xff]
        %v279 = vld [vmem:[%s234 + $0x80] sm:$0xff]
        %v280 = vld [vmem:[%s234 + $0x88] sm:$0xff]
        %v281 = vld [vmem:[%s234 + $0x90] sm:$0xff]
        %v282 = vld [vmem:[%s234 + $0x98] sm:$0xff]
        %v283 = vld [vmem:[%s234 + $0xa0] sm:$0xff]
        %v284 = vld [vmem:[%s234 + $0xa8] sm:$0xff]
        %v285 = vld [vmem:[%s234 + $0xb0] sm:$0xff]
        %v286 = vld [vmem:[%s234 + $0xb8] sm:$0xff]
        %v287 = vld [vmem:[%s234 + $0xc0] sm:$0xff]
        %v288 = vld [vmem:[%s234 + $0xc8] sm:$0xff]
        %v289 = vld [vmem:[%s234 + $0xd0] sm:$0xff]
        %v290 = vld [vmem:[%s234 + $0xd8] sm:$0xff]
        %v291 = vld [vmem:[%s234 + $0xe0] sm:$0xff]
        %v292 = vld [vmem:[%s234 + $0xe8] sm:$0xff]
        %v293 = vld [vmem:[%s234 + $0xf0] sm:$0xff]
        %v294 = vld [vmem:[%s234 + $0xf8] sm:$0xff]
        %v295 = vld [vmem:[%s1] sm:$0xff]
        %v296 = vld [vmem:[%s1 + $0x8] sm:$0xff]
        %v297 = vld [vmem:[%s2] sm:$0xff]
        %v298 = vld [vmem:[%s2 + $0x8] sm:$0xff]
        %300 = vset.pattern.permute.xlu0 0
        %301 = vperm.xlu0 %300, %v297
        %v302 = vpop.permute.xlu0 %301
        %305 = vset.pattern.permute.xlu0 0
        %306 = vperm.xlu0 %305, %v298
        %v307 = vpop.permute.xlu0 %306
        %309 = vmatprep.subr.mxu0 %v294
        %310 = vmatpush1.msra.mxu0 %v293
        %311 = vmatprep.subr.mxu0 %v292
        %312 = vmatpush1.msra.mxu0 %v291
        %313 = vmatprep.subr.mxu0 %v290
        %314 = vmatpush1.msra.mxu0 %v289
        %315 = vmatprep.subr.mxu0 %v288
        %316 = vmatpush1.msra.mxu0 %v287
        %317 = vmatprep.subr.mxu0 %v286
        %318 = vmatpush1.msra.mxu0 %v285
        %319 = vmatprep.subr.mxu0 %v284
        %320 = vmatpush1.msra.mxu0 %v283
        %321 = vmatprep.subr.mxu0 %v282
        %322 = vmatpush1.msra.mxu0 %v281
        %323 = vmatprep.subr.mxu0 %v280
        %324 = vmatpush1.msra.mxu0 %v279
        %325 = vmatprep.subr.mxu0 %v278
        %326 = vmatpush1.msra.mxu0 %v277
        %327 = vmatprep.subr.mxu0 %v276
        %328 = vmatpush1.msra.mxu0 %v275
        %329 = vmatprep.subr.mxu0 %v274
        %330 = vmatpush1.msra.mxu0 %v273
        %331 = vmatprep.subr.mxu0 %v272
        %332 = vmatpush1.msra.mxu0 %v271
        %333 = vmatprep.subr.mxu0 %v270
        %334 = vmatpush1.msra.mxu0 %v269
        %335 = vmatprep.subr.mxu0 %v268
        %336 = vmatpush1.msra.mxu0 %v267
        %337 = vmatprep.subr.mxu0 %v266
        %338 = vmatpush1.msra.mxu0 %v265
        %339 = vmatprep.subr.mxu0 %v264
        %340 = vmatpush1.msra.mxu0 %v263
        %341 = vmatprep.subr.mxu0 0.0
        %342 = vmatpush2.msra.mxu0 0.0
        %343 = vmatprep.subr.mxu0 0.0
        %344 = vmatpush2.msra.mxu0 0.0
        %345 = vmatprep.subr.mxu0 0.0
        %346 = vmatpush2.msra.mxu0 0.0
        %347 = vmatprep.subr.mxu0 0.0
        %348 = vmatpush2.msra.mxu0 0.0
        %349 = vmatprep.subr.mxu0 0.0
        %350 = vmatpush2.msra.mxu0 0.0
        %351 = vmatprep.subr.mxu0 0.0
        %352 = vmatpush2.msra.mxu0 0.0
        %353 = vmatprep.subr.mxu0 0.0
        %354 = vmatpush2.msra.mxu0 0.0
        %355 = vmatprep.subr.mxu0 0.0
        %356 = vmatpush2.msra.mxu0 0.0
        %357 = vmatprep.subr.mxu0 0.0
        %358 = vmatpush2.msra.mxu0 0.0
        %359 = vmatprep.subr.mxu0 0.0
        %360 = vmatpush2.msra.mxu0 0.0
        %361 = vmatprep.subr.mxu0 0.0
        %362 = vmatpush2.msra.mxu0 0.0
        %363 = vmatprep.subr.mxu0 0.0
        %364 = vmatpush2.msra.mxu0 0.0
        %365 = vmatprep.subr.mxu0 0.0
        %366 = vmatpush2.msra.mxu0 0.0
        %367 = vmatprep.subr.mxu0 0.0
        %368 = vmatpush2.msra.mxu0 0.0
        %369 = vmatprep.subr.mxu0 0.0
        %370 = vmatpush2.msra.mxu0 0.0
        %371 = vmatprep.subr.mxu0 0.0
        %372 = vmatpush2.msra.mxu0 0.0
        %373 = vmatprep.mubr.f32.mxu0 0.0
        %374 = vmatmul.mubr.f32.gmra.mxu0 %v295
        %v375 = vpop.f32.mrf.mxu0
        %v376 = vadd.f32 %v302, %v375
        %v377 = vpop.f32.mrf.mxu0
        %v378 = vadd.f32 %v302, %v377
        %379 = vmatprep.mubr.f32.mxu0 0.0
        %380 = vmatmul.mubr.f32.gmra.mxu0 %v296
        %v381 = vpop.f32.mrf.mxu0
        %v382 = vadd.f32 %v307, %v381
        %v383 = vpop.f32.mrf.mxu0
        %v384 = vadd.f32 %v307, %v383
        %385 = vdwg.mxu0
        %v386 = vmul.f32 %v376, 0.5
        %v387 = vmul.f32 %v378, 0.5
        %v388 = vmul.f32 %v382, 0.5
        %v389 = vmul.f32 %v384, 0.5
        %v390 = vmul.f32 %v376, 0.70710677
        %v391 = vmul.f32 %v378, 0.70710677
        %v392 = vmul.f32 %v382, 0.70710677
        %v393 = vmul.f32 %v384, 0.70710677
        %v394 = verf.f32.pop %v390
        %v395 = verf.f32.pop %v391
        %v396 = verf.f32.pop %v392
        %v397 = verf.f32.pop %v393
        %v398 = vadd.f32 %v394, 1.0
        %v399 = vadd.f32 %v395, 1.0
        %v400 = vadd.f32 %v396, 1.0
        %v401 = vadd.f32 %v397, 1.0
        %v402 = vmul.f32 %v386, %v398
        %v403 = vmul.f32 %v387, %v399
        %v404 = vmul.f32 %v388, %v400
        %v405 = vmul.f32 %v389, %v401
        %v406 = vld [vmem:[%s3] sm:$0xff]
        %v407 = vld [vmem:[%s3 + $0x8] sm:$0xff]
        %v408 = vld [vmem:[%s3 + $0x10] sm:$0xff]
        %v409 = vld [vmem:[%s3 + $0x18] sm:$0xff]
        %v410 = vld [vmem:[%s3 + $0x20] sm:$0xff]
        %v411 = vld [vmem:[%s3 + $0x28] sm:$0xff]
        %v412 = vld [vmem:[%s3 + $0x30] sm:$0xff]
        %v413 = vld [vmem:[%s3 + $0x38] sm:$0xff]
        %v414 = vld [vmem:[%s3 + $0x40] sm:$0xff]
        %v415 = vld [vmem:[%s3 + $0x48] sm:$0xff]
        %v416 = vld [vmem:[%s3 + $0x50] sm:$0xff]
        %v417 = vld [vmem:[%s3 + $0x58] sm:$0xff]
        %v418 = vld [vmem:[%s3 + $0x60] sm:$0xff]
        %v419 = vld [vmem:[%s3 + $0x68] sm:$0xff]
        %v420 = vld [vmem:[%s3 + $0x70] sm:$0xff]
        %v421 = vld [vmem:[%s3 + $0x78] sm:$0xff]
        %v422 = vld [vmem:[%s4] sm:$0xff]
        %v423 = vld [vmem:[%s4 + $0x8] sm:$0xff]
        %v424 = vld [vmem:[%s4 + $0x10] sm:$0xff]
        %v425 = vld [vmem:[%s4 + $0x18] sm:$0xff]
        %v426 = vld [vmem:[%s4 + $0x20] sm:$0xff]
        %v427 = vld [vmem:[%s4 + $0x28] sm:$0xff]
        %v428 = vld [vmem:[%s4 + $0x30] sm:$0xff]
        %v429 = vld [vmem:[%s4 + $0x38] sm:$0xff]
        %v430 = vld [vmem:[%s4 + $0x40] sm:$0xff]
        %v431 = vld [vmem:[%s4 + $0x48] sm:$0xff]
        %v432 = vld [vmem:[%s4 + $0x50] sm:$0xff]
        %v433 = vld [vmem:[%s4 + $0x58] sm:$0xff]
        %v434 = vld [vmem:[%s4 + $0x60] sm:$0xff]
        %v435 = vld [vmem:[%s4 + $0x68] sm:$0xff]
        %v436 = vld [vmem:[%s4 + $0x70] sm:$0xff]
        %v437 = vld [vmem:[%s4 + $0x78] sm:$0xff]
        %439 = vset.pattern.permute.xlu0 0
        %440 = vperm.xlu0 %439, %v422
        %v441 = vpop.permute.xlu0 %440
        %444 = vset.pattern.permute.xlu0 0
        %445 = vperm.xlu0 %444, %v423
        %v446 = vpop.permute.xlu0 %445
        %449 = vset.pattern.permute.xlu0 0
        %450 = vperm.xlu0 %449, %v424
        %v451 = vpop.permute.xlu0 %450
        %454 = vset.pattern.permute.xlu0 0
        %455 = vperm.xlu0 %454, %v425
        %v456 = vpop.permute.xlu0 %455
        %459 = vset.pattern.permute.xlu0 0
        %460 = vperm.xlu0 %459, %v426
        %v461 = vpop.permute.xlu0 %460
        %464 = vset.pattern.permute.xlu0 0
        %465 = vperm.xlu0 %464, %v427
        %v466 = vpop.permute.xlu0 %465
        %469 = vset.pattern.permute.xlu0 0
        %470 = vperm.xlu0 %469, %v428
        %v471 = vpop.permute.xlu0 %470
        %474 = vset.pattern.permute.xlu0 0
        %475 = vperm.xlu0 %474, %v429
        %v476 = vpop.permute.xlu0 %475
        %479 = vset.pattern.permute.xlu0 0
        %480 = vperm.xlu0 %479, %v430
        %v481 = vpop.permute.xlu0 %480
        %484 = vset.pattern.permute.xlu0 0
        %485 = vperm.xlu0 %484, %v431
        %v486 = vpop.permute.xlu0 %485
        %489 = vset.pattern.permute.xlu0 0
        %490 = vperm.xlu0 %489, %v432
        %v491 = vpop.permute.xlu0 %490
        %494 = vset.pattern.permute.xlu0 0
        %495 = vperm.xlu0 %494, %v433
        %v496 = vpop.permute.xlu0 %495
        %499 = vset.pattern.permute.xlu0 0
        %500 = vperm.xlu0 %499, %v434
        %v501 = vpop.permute.xlu0 %500
        %504 = vset.pattern.permute.xlu0 0
        %505 = vperm.xlu0 %504, %v435
        %v506 = vpop.permute.xlu0 %505
        %509 = vset.pattern.permute.xlu0 0
        %510 = vperm.xlu0 %509, %v436
        %v511 = vpop.permute.xlu0 %510
        %514 = vset.pattern.permute.xlu0 0
        %515 = vperm.xlu0 %514, %v437
        %v516 = vpop.permute.xlu0 %515
        %vm518 = vcmask 130048
        %v520 = vsel %vm518, %v406, 0
        %v523 = vsel %vm518, %v407, 0
        %v526 = vsel %vm518, %v408, 0
        %v529 = vsel %vm518, %v409, 0
        %v532 = vsel %vm518, %v410, 0
        %v535 = vsel %vm518, %v411, 0
        %v538 = vsel %vm518, %v412, 0
        %v541 = vsel %vm518, %v413, 0
        %v544 = vsel %vm518, %v414, 0
        %v547 = vsel %vm518, %v415, 0
        %v550 = vsel %vm518, %v416, 0
        %v553 = vsel %vm518, %v417, 0
        %v556 = vsel %vm518, %v418, 0
        %v559 = vsel %vm518, %v419, 0
        %v562 = vsel %vm518, %v420, 0
        %v565 = vsel %vm518, %v421, 0
        %567 = vmatprep.subr.mxu0 0.0
        %568 = vmatpush1.msra.mxu0 0.0
        %569 = vmatprep.subr.mxu0 0.0
        %570 = vmatpush1.msra.mxu0 0.0
        %571 = vmatprep.subr.mxu0 0.0
        %572 = vmatpush1.msra.mxu0 0.0
        %573 = vmatprep.subr.mxu0 0.0
        %574 = vmatpush1.msra.mxu0 0.0
        %575 = vmatprep.subr.mxu0 0.0
        %576 = vmatpush1.msra.mxu0 0.0
        %577 = vmatprep.subr.mxu0 0.0
        %578 = vmatpush1.msra.mxu0 0.0
        %579 = vmatprep.subr.mxu0 0.0
        %580 = vmatpush1.msra.mxu0 0.0
        %581 = vmatprep.subr.mxu0 0.0
        %582 = vmatpush1.msra.mxu0 0.0
        %583 = vmatprep.subr.mxu0 0.0
        %584 = vmatpush1.msra.mxu0 0.0
        %585 = vmatprep.subr.mxu0 0.0
        %586 = vmatpush1.msra.mxu0 0.0
        %587 = vmatprep.subr.mxu0 0.0
        %588 = vmatpush1.msra.mxu0 0.0
        %589 = vmatprep.subr.mxu0 0.0
        %590 = vmatpush1.msra.mxu0 0.0
        %591 = vmatprep.subr.mxu0 0.0
        %592 = vmatpush1.msra.mxu0 0.0
        %593 = vmatprep.subr.mxu0 0.0
        %594 = vmatpush1.msra.mxu0 0.0
        %595 = vmatprep.subr.mxu0 %v405
        %596 = vmatpush1.msra.mxu0 %v404
        %597 = vmatprep.subr.mxu0 %v403
        %598 = vmatpush1.msra.mxu0 %v402
        %599 = vmatprep.subr.mxu0 0.0
        %600 = vmatpush2.msra.mxu0 0.0
        %601 = vmatprep.subr.mxu0 0.0
        %602 = vmatpush2.msra.mxu0 0.0
        %603 = vmatprep.subr.mxu0 0.0
        %604 = vmatpush2.msra.mxu0 0.0
        %605 = vmatprep.subr.mxu0 0.0
        %606 = vmatpush2.msra.mxu0 0.0
        %607 = vmatprep.subr.mxu0 0.0
        %608 = vmatpush2.msra.mxu0 0.0
        %609 = vmatprep.subr.mxu0 0.0
        %610 = vmatpush2.msra.mxu0 0.0
        %611 = vmatprep.subr.mxu0 0.0
        %612 = vmatpush2.msra.mxu0 0.0
        %613 = vmatprep.subr.mxu0 0.0
        %614 = vmatpush2.msra.mxu0 0.0
        %615 = vmatprep.subr.mxu0 0.0
        %616 = vmatpush2.msra.mxu0 0.0
        %617 = vmatprep.subr.mxu0 0.0
        %618 = vmatpush2.msra.mxu0 0.0
        %619 = vmatprep.subr.mxu0 0.0
        %620 = vmatpush2.msra.mxu0 0.0
        %621 = vmatprep.subr.mxu0 0.0
        %622 = vmatpush2.msra.mxu0 0.0
        %623 = vmatprep.subr.mxu0 0.0
        %624 = vmatpush2.msra.mxu0 0.0
        %625 = vmatprep.subr.mxu0 0.0
        %626 = vmatpush2.msra.mxu0 0.0
        %627 = vmatprep.subr.mxu0 0.0
        %628 = vmatpush2.msra.mxu0 0.0
        %629 = vmatprep.subr.mxu0 0.0
        %630 = vmatpush2.msra.mxu0 0.0
        %631 = vmatprep.mubr.f32.mxu0 0.0
        %632 = vmatmul.mubr.f32.gmra.mxu0 %v520
        %v633 = vpop.f32.mrf.mxu0
        %v634 = vadd.f32 %v441, %v633
        %v635 = vpop.f32.mrf.mxu0
        %v636 = vadd.f32 %v441, %v635
        %637 = vmatprep.mubr.f32.mxu0 0.0
        %638 = vmatmul.mubr.f32.gmra.mxu0 %v523
        %v639 = vpop.f32.mrf.mxu0
        %v640 = vadd.f32 %v446, %v639
        %v641 = vpop.f32.mrf.mxu0
        %v642 = vadd.f32 %v446, %v641
        %643 = vmatprep.mubr.f32.mxu0 0.0
        %644 = vmatmul.mubr.f32.gmra.mxu0 %v526
        %v645 = vpop.f32.mrf.mxu0
        %v646 = vadd.f32 %v451, %v645
        %v647 = vpop.f32.mrf.mxu0
        %v648 = vadd.f32 %v451, %v647
        %649 = vmatprep.mubr.f32.mxu0 0.0
        %650 = vmatmul.mubr.f32.gmra.mxu0 %v529
        %v651 = vpop.f32.mrf.mxu0
        %v652 = vadd.f32 %v456, %v651
        %v653 = vpop.f32.mrf.mxu0
        %v654 = vadd.f32 %v456, %v653
        %655 = vmatprep.mubr.f32.mxu0 0.0
        %656 = vmatmul.mubr.f32.gmra.mxu0 %v532
        %v657 = vpop.f32.mrf.mxu0
        %v658 = vadd.f32 %v461, %v657
        %v659 = vpop.f32.mrf.mxu0
        %v660 = vadd.f32 %v461, %v659
        %661 = vmatprep.mubr.f32.mxu0 0.0
        %662 = vmatmul.mubr.f32.gmra.mxu0 %v535
        %v663 = vpop.f32.mrf.mxu0
        %v664 = vadd.f32 %v466, %v663
        %v665 = vpop.f32.mrf.mxu0
        %v666 = vadd.f32 %v466, %v665
        %667 = vmatprep.mubr.f32.mxu0 0.0
        %668 = vmatmul.mubr.f32.gmra.mxu0 %v538
        %v669 = vpop.f32.mrf.mxu0
        %v670 = vadd.f32 %v471, %v669
        %v671 = vpop.f32.mrf.mxu0
        %v672 = vadd.f32 %v471, %v671
        %673 = vmatprep.mubr.f32.mxu0 0.0
        %674 = vmatmul.mubr.f32.gmra.mxu0 %v541
        %v675 = vpop.f32.mrf.mxu0
        %v676 = vadd.f32 %v476, %v675
        %v677 = vpop.f32.mrf.mxu0
        %v678 = vadd.f32 %v476, %v677
        %679 = vmatprep.mubr.f32.mxu0 0.0
        %680 = vmatmul.mubr.f32.gmra.mxu0 %v544
        %v681 = vpop.f32.mrf.mxu0
        %v682 = vadd.f32 %v481, %v681
        %v683 = vpop.f32.mrf.mxu0
        %v684 = vadd.f32 %v481, %v683
        %685 = vmatprep.mubr.f32.mxu0 0.0
        %686 = vmatmul.mubr.f32.gmra.mxu0 %v547
        %v687 = vpop.f32.mrf.mxu0
        %v688 = vadd.f32 %v486, %v687
        %v689 = vpop.f32.mrf.mxu0
        %v690 = vadd.f32 %v486, %v689
        %691 = vmatprep.mubr.f32.mxu0 0.0
        %692 = vmatmul.mubr.f32.gmra.mxu0 %v550
        %v693 = vpop.f32.mrf.mxu0
        %v694 = vadd.f32 %v491, %v693
        %v695 = vpop.f32.mrf.mxu0
        %v696 = vadd.f32 %v491, %v695
        %697 = vmatprep.mubr.f32.mxu0 0.0
        %698 = vmatmul.mubr.f32.gmra.mxu0 %v553
        %v699 = vpop.f32.mrf.mxu0
        %v700 = vadd.f32 %v496, %v699
        %v701 = vpop.f32.mrf.mxu0
        %v702 = vadd.f32 %v496, %v701
        %703 = vmatprep.mubr.f32.mxu0 0.0
        %704 = vmatmul.mubr.f32.gmra.mxu0 %v556
        %v705 = vpop.f32.mrf.mxu0
        %v706 = vadd.f32 %v501, %v705
        %v707 = vpop.f32.mrf.mxu0
        %v708 = vadd.f32 %v501, %v707
        %709 = vmatprep.mubr.f32.mxu0 0.0
        %710 = vmatmul.mubr.f32.gmra.mxu0 %v559
        %v711 = vpop.f32.mrf.mxu0
        %v712 = vadd.f32 %v506, %v711
        %v713 = vpop.f32.mrf.mxu0
        %v714 = vadd.f32 %v506, %v713
        %715 = vmatprep.mubr.f32.mxu0 0.0
        %716 = vmatmul.mubr.f32.gmra.mxu0 %v562
        %v717 = vpop.f32.mrf.mxu0
        %v718 = vadd.f32 %v511, %v717
        %v719 = vpop.f32.mrf.mxu0
        %v720 = vadd.f32 %v511, %v719
        %721 = vmatprep.mubr.f32.mxu0 0.0
        %722 = vmatmul.mubr.f32.gmra.mxu0 %v565
        %v723 = vpop.f32.mrf.mxu0
        %v724 = vadd.f32 %v516, %v723
        %v725 = vpop.f32.mrf.mxu0
        %v726 = vadd.f32 %v516, %v725
        %727 = vdwg.mxu0
        %v728 = vadd.f32 %v634, %v263
        %v729 = vadd.f32 %v636, %v264
        %v730 = vadd.f32 %v640, %v265
        %v731 = vadd.f32 %v642, %v266
        %v732 = vadd.f32 %v646, %v267
        %v733 = vadd.f32 %v648, %v268
        %v734 = vadd.f32 %v652, %v269
        %v735 = vadd.f32 %v654, %v270
        %v736 = vadd.f32 %v658, %v271
        %v737 = vadd.f32 %v660, %v272
        %v738 = vadd.f32 %v664, %v273
        %v739 = vadd.f32 %v666, %v274
        %v740 = vadd.f32 %v670, %v275
        %v741 = vadd.f32 %v672, %v276
        %v742 = vadd.f32 %v676, %v277
        %v743 = vadd.f32 %v678, %v278
        %v744 = vadd.f32 %v682, %v279
        %v745 = vadd.f32 %v684, %v280
        %v746 = vadd.f32 %v688, %v281
        %v747 = vadd.f32 %v690, %v282
        %v748 = vadd.f32 %v694, %v283
        %v749 = vadd.f32 %v696, %v284
        %v750 = vadd.f32 %v700, %v285
        %v751 = vadd.f32 %v702, %v286
        %v752 = vadd.f32 %v706, %v287
        %v753 = vadd.f32 %v708, %v288
        %v754 = vadd.f32 %v712, %v289
        %v755 = vadd.f32 %v714, %v290
        %v756 = vadd.f32 %v718, %v291
        %v757 = vadd.f32 %v720, %v292
        %v758 = vadd.f32 %v724, %v293
        %v759 = vadd.f32 %v726, %v294
        %760 = vst [vmem:[%s260] sm:$0xff] %v728
        %761 = vst [vmem:[%s260 + $0x8] sm:$0xff] %v729
        %762 = vst [vmem:[%s260 + $0x10] sm:$0xff] %v730
        %763 = vst [vmem:[%s260 + $0x18] sm:$0xff] %v731
        %764 = vst [vmem:[%s260 + $0x20] sm:$0xff] %v732
        %765 = vst [vmem:[%s260 + $0x28] sm:$0xff] %v733
        %766 = vst [vmem:[%s260 + $0x30] sm:$0xff] %v734
        %767 = vst [vmem:[%s260 + $0x38] sm:$0xff] %v735
        %768 = vst [vmem:[%s260 + $0x40] sm:$0xff] %v736
        %769 = vst [vmem:[%s260 + $0x48] sm:$0xff] %v737
        %770 = vst [vmem:[%s260 + $0x50] sm:$0xff] %v738
        %771 = vst [vmem:[%s260 + $0x58] sm:$0xff] %v739
        %772 = vst [vmem:[%s260 + $0x60] sm:$0xff] %v740
        %773 = vst [vmem:[%s260 + $0x68] sm:$0xff] %v741
        %774 = vst [vmem:[%s260 + $0x70] sm:$0xff] %v742
        %775 = vst [vmem:[%s260 + $0x78] sm:$0xff] %v743
        %776 = vst [vmem:[%s260 + $0x80] sm:$0xff] %v744
        %777 = vst [vmem:[%s260 + $0x88] sm:$0xff] %v745
        %778 = vst [vmem:[%s260 + $0x90] sm:$0xff] %v746
        %779 = vst [vmem:[%s260 + $0x98] sm:$0xff] %v747
        %780 = vst [vmem:[%s260 + $0xa0] sm:$0xff] %v748
        %781 = vst [vmem:[%s260 + $0xa8] sm:$0xff] %v749
        %782 = vst [vmem:[%s260 + $0xb0] sm:$0xff] %v750
        %783 = vst [vmem:[%s260 + $0xb8] sm:$0xff] %v751
        %784 = vst [vmem:[%s260 + $0xc0] sm:$0xff] %v752
        %785 = vst [vmem:[%s260 + $0xc8] sm:$0xff] %v753
        %786 = vst [vmem:[%s260 + $0xd0] sm:$0xff] %v754
        %787 = vst [vmem:[%s260 + $0xd8] sm:$0xff] %v755
        %788 = vst [vmem:[%s260 + $0xe0] sm:$0xff] %v756
        %789 = vst [vmem:[%s260 + $0xe8] sm:$0xff] %v757
        %790 = vst [vmem:[%s260 + $0xf0] sm:$0xff] %v758
        %791 = vst [vmem:[%s260 + $0xf8] sm:$0xff] %v759
        %s792 = sand.u32 %s156, 1
        %s793 = scalar_lea.sflag [#allocation4], %s792
        %s794 = sand.u32 %s156, 1
        %s795 = smul.addr %s794, 256
        %s796 = scalar_lea.vmem [#allocation5], %s795
        // Predicated region
        $region45: #{tpu_custom_call.1} parent=39 // pred_check
          %p797 = pneg %p166
        $region46: #{tpu_custom_call.1} parent=39 // pred_check_branch
          %799 = sbr.rel (%p797) target = $region48
        $region47: #{tpu_custom_call.1} parent=39 // pred_region
          %s800 = smul.u32 2, %s27
          %s802 = ssub.s32 4096, 4096
          %803 = vsyncadd %s793, %s802
          %s804 = smul.addr %s26, 32
          %s805 = sadd.s32 %s800, %s804
          %s806 = smul.addr %s805, 128
          %s807 = scalar_lea.hbm %s5, %s806
          %s808 = sshll.u32 %s796, 4
          %s809 = int_to_ptr.vmem [resolvable:$true] %s808
          %814 = dma.vmem_to_hbm [thread:$0]  %s809, 4096, %s807, %s793, 256, 256, 16
        $region48: #{tpu_custom_call.1} parent=39 // pred_fallthru
          _
      $region40: #{tpu_custom_call.1} parent=5 // pred_fallthru
        _
      %p815 = scmp.le.s32.totalorder 2, %s17
      // Predicated region
      $region49: #{tpu_custom_call.1} parent=5 // pred_check
        %p816 = pneg %p815
      $region50: #{tpu_custom_call.1} parent=5 // pred_check_branch
        %818 = sbr.rel (%p816) target = $region52
      $region51: #{tpu_custom_call.1} parent=5 // pred_region
        %s819 = ssub.s32 %s17, 2
        // Predicated region
        $region53: #{tpu_custom_call.1} parent=51 // pred_check
          %p820 = pneg %p172
        $region54: #{tpu_custom_call.1} parent=51 // pred_check_branch
          %822 = sbr.rel (%p820) target = $region56
        $region55: #{tpu_custom_call.1} parent=51 // pred_region
          %s823 = sand.u32 %s157, 1
          %s824 = scalar_lea.sflag [#allocation4], %s823
          %s825 = sand.u32 %s157, 1
          %s826 = smul.addr %s825, 256
          %s827 = scalar_lea.vmem [#allocation5], %s826
          %828 = dma.done %s824, 4096
        $region56: #{tpu_custom_call.1} parent=51 // pred_fallthru
          _
      $region52: #{tpu_custom_call.1} parent=5 // pred_fallthru
        _
    $region6: #{tpu_custom_call.1} parent=1 // loop_footer
      %s21 = sadd.s32 1, %s17
    $region7: #{tpu_custom_call.1} parent=1 // loop_footer_branch
      %16 = sbr.rel target = $region3
    $region8: #{tpu_custom_call.1} parent=1 // loop_exit
      _
    %829 = vsyncpa [#allocation3], 1
    %s830 = scalar_lea.sflag [#allocation3], 1
    %831 = vsyncpa %s830, 1
    %832 = vsyncpa [#allocation4], 1
    %s833 = scalar_lea.sflag [#allocation4], 1
    %834 = vsyncpa %s833, 1

</llo_original>
